<compile_context>
chip_gen: v7x
topology: tpu7x:2x2x1
jax: 0.10.0
libtpu: 0.0.40
codegen_flags: <defaults>
</compile_context>

<pallas_src>
import functools

import jax
import jax.numpy as jnp
from jax import lax
from jax.experimental import pallas as pl
from jax.experimental.pallas import tpu as pltpu


def _round_up(x, m):
    return (x + m - 1) // m * m


# --------------------------------------------------------------------------
# (1) Input projection: xg[t] = x[t] @ W_ih^T + b_ih for ALL timesteps.
#     One big (SP*BP, E) x (E, 3*HP) matmul, tiled over row chunks.
# --------------------------------------------------------------------------
def _proj_kernel(x_ref, w_ref, b_ref, xg_ref):
    # x_ref: (ROWS, E) bf16, w_ref: (E, 3*HP) bf16, b_ref: (1, 3*HP) f32
    xg_ref[...] = (
        jnp.dot(x_ref[...], w_ref[...], preferred_element_type=jnp.float32)
        + b_ref[...]
    )


# --------------------------------------------------------------------------
# (2) GRU recurrence: one grid step == one chunk of T_CHUNK timesteps.
# --------------------------------------------------------------------------
def _gru_kernel(xg_ref, h0_ref, whh_ref, bhh_ref, out_ref, h_scr):
    """Refs:
      xg_ref : (T_CHUNK, BP, 3*HP) f32   precomputed x_t @ W_ih^T + b_ih
      h0_ref : (BP, HP)            f32   initial hidden state (padded)
      whh_ref: (HP, 3*HP)          bf16  W_hh^T, per-gate blocks 128-aligned
      bhh_ref: (BP, 3*HP)          f32   b_hh pre-broadcast over batch
      out_ref: (T_CHUNK, BP, HP)   f32   h_t for every step of the chunk
      h_scr  : (BP, HP)            f32   hidden carry across grid steps
    """
    c = pl.program_id(0)
    hp = h0_ref.shape[-1]
    t_chunk = xg_ref.shape[0]

    @pl.when(c == 0)
    def _():
        h_scr[...] = h0_ref[...]

    bhh = bhh_ref[...]  # hoisted once per chunk (small, 3 vregs)

    def step(i, h):
        xg = xg_ref[i]                                      # (BP, 3*HP) f32
        hg = jnp.dot(h.astype(jnp.bfloat16), whh_ref[...],
                     preferred_element_type=jnp.float32) + bhh
        # lane-aligned per-gate slices (hp is a multiple of 128)
        r = jax.nn.sigmoid(xg[:, 0 * hp:1 * hp] + hg[:, 0 * hp:1 * hp])
        z = jax.nn.sigmoid(xg[:, 1 * hp:2 * hp] + hg[:, 1 * hp:2 * hp])
        n = jnp.tanh(xg[:, 2 * hp:3 * hp] + r * hg[:, 2 * hp:3 * hp])
        h_new = (1.0 - z) * n + z * h
        out_ref[i] = h_new
        return h_new

    h_scr[...] = lax.fori_loop(0, t_chunk, step, h_scr[...], unroll=True)


# --------------------------------------------------------------------------
# Wrapper: padding / weight layout / pallas_call plumbing.
# --------------------------------------------------------------------------
def encoder_forward(inputs, hidden, params, *, t_chunk=4):
    """inputs: (B, S) int32 token ids; hidden: (1, B, H) f32.
    Returns (output, hidden): output (B, S, H), hidden (1, B, H) — matching
    nn.GRU(batch_first=True)."""
    emb_w = params["embedding"]                 # (V, E)
    B, S = inputs.shape
    E = emb_w.shape[1]
    H = hidden.shape[-1]

    HP = _round_up(H, 128)                      # lane-aligned hidden
    BP = _round_up(B, 8)                        # sublane-aligned batch
    SP = _round_up(S, t_chunk)                  # time padded to chunk multiple
    rows = t_chunk * BP                         # projection row tile
    n_chunks = SP // t_chunk

    # --- glue: embedding gather (data-dependent lookup, plain JAX) ---
    embedded = jnp.take(emb_w, inputs, axis=0)  # (B, S, E)

    # time-major, pad batch & time with zeros
    x_tbe = jnp.transpose(embedded, (1, 0, 2))  # (S, B, E)
    x_tbe = jnp.pad(x_tbe, ((0, SP - S), (0, BP - B), (0, 0)))
    x2d = x_tbe.reshape(SP * BP, E).astype(jnp.bfloat16)

    # --- weight layout: each gate (r,z,n) gets its own 128-aligned column
    #     block; bf16 for the MXU, f32 everywhere else ---
    w_ih, w_hh = params["w_ih"], params["w_hh"]     # (3H, E), (3H, H)
    b_ih, b_hh = params["b_ih"], params["b_hh"]     # (3H,), (3H,)

    def pad_gates_T(w, in_dim, in_pad):
        # w: (3H, in_dim) -> (in_pad, 3*HP); gate g in cols [g*HP, g*HP + H)
        out = jnp.zeros((in_pad, 3 * HP), w.dtype)
        for g in range(3):
            out = out.at[:in_dim, g * HP:g * HP + H].set(
                w[g * H:(g + 1) * H, :].T)
        return out

    def pad_gates_b(b):
        out = jnp.zeros((3 * HP,), b.dtype)
        for g in range(3):
            out = out.at[g * HP:g * HP + H].set(b[g * H:(g + 1) * H])
        return out

    wih_p = pad_gates_T(w_ih, E, E).astype(jnp.bfloat16)           # (E, 3*HP)
    whh_p = pad_gates_T(w_hh, H, HP).astype(jnp.bfloat16)          # (HP, 3*HP)
    bih_p = pad_gates_b(b_ih).reshape(1, 3 * HP).astype(jnp.float32)
    bhh_p = jnp.broadcast_to(
        pad_gates_b(b_hh).astype(jnp.float32), (BP, 3 * HP))       # (BP, 3*HP)

    h0 = jnp.pad(hidden[0].astype(jnp.float32),
                 ((0, BP - B), (0, HP - H)))                       # (BP, HP)

    # --- (1) batched input projection (parallel over time chunks) ---
    xg2d = pl.pallas_call(
        _proj_kernel,
        out_shape=jax.ShapeDtypeStruct((SP * BP, 3 * HP), jnp.float32),
        grid=(n_chunks,),
        in_specs=[
            pl.BlockSpec((rows, E), lambda i: (i, 0)),       # x chunk
            pl.BlockSpec((E, 3 * HP), lambda i: (0, 0)),     # W_ih^T
            pl.BlockSpec((1, 3 * HP), lambda i: (0, 0)),     # b_ih
        ],
        out_specs=pl.BlockSpec((rows, 3 * HP), lambda i: (i, 0)),
        compiler_params=pltpu.CompilerParams(
            dimension_semantics=("parallel",)),   # shards across TCs on v7x
    )(x2d, wih_p, bih_p)
    xg = xg2d.reshape(SP, BP, 3 * HP)

    # --- (2) sequential GRU recurrence, chunked over time ---
    out_tbh = pl.pallas_call(
        _gru_kernel,
        out_shape=jax.ShapeDtypeStruct((SP, BP, HP), jnp.float32),
        grid=(n_chunks,),
        in_specs=[
            pl.BlockSpec((t_chunk, BP, 3 * HP), lambda c: (c, 0, 0)),  # xg
            pl.BlockSpec((BP, HP), lambda c: (0, 0)),                  # h0
            pl.BlockSpec((HP, 3 * HP), lambda c: (0, 0)),              # W_hh^T
            pl.BlockSpec((BP, 3 * HP), lambda c: (0, 0)),              # b_hh
        ],
        out_specs=pl.BlockSpec((t_chunk, BP, HP), lambda c: (c, 0, 0)),
        scratch_shapes=[pltpu.VMEM((BP, HP), jnp.float32)],
        compiler_params=pltpu.CompilerParams(
            dimension_semantics=("arbitrary",)),  # true time recurrence
    )(xg, h0, whh_p, bhh_p)

    output = jnp.transpose(out_tbh[:S, :B, :H], (1, 0, 2))   # (B, S, H)
    h_n = out_tbh[S - 1, :B, :H][None]                       # h at last step
    return output, h_n


# --------------------------------------------------------------------------
# Pure-JAX f32 reference (PyTorch GRU semantics, gate order r, z, n).
# --------------------------------------------------------------------------
def reference_forward(inputs, hidden, params):
    emb = params["embedding"][inputs]            # (B, S, E)
    w_ih, w_hh = params["w_ih"], params["w_hh"]
    b_ih, b_hh = params["b_ih"], params["b_hh"]
    H = hidden.shape[-1]

    def step(h, x_t):
        xg = x_t @ w_ih.T + b_ih
        hg = h @ w_hh.T + b_hh
        r = jax.nn.sigmoid(xg[:, :H] + hg[:, :H])
        z = jax.nn.sigmoid(xg[:, H:2 * H] + hg[:, H:2 * H])
        n = jnp.tanh(xg[:, 2 * H:] + r * hg[:, 2 * H:])
        h_new = (1.0 - z) * n + z * h
        return h_new, h_new

    x_tbe = jnp.transpose(emb, (1, 0, 2))        # (S, B, E)
    h_last, out_tbh = jax.lax.scan(step, hidden[0], x_tbe)
    return jnp.transpose(out_tbh, (1, 0, 2)), h_last[None]


def init_params(key, vocab_size, embed_size, hidden_size):
    k0, k1, k2, k3, k4 = jax.random.split(key, 5)
    scale = 0.1
    return {
        "embedding": scale * jax.random.normal(k0, (vocab_size, embed_size), jnp.float32),
        "w_ih": scale * jax.random.normal(k1, (3 * hidden_size, embed_size), jnp.float32),
        "w_hh": scale * jax.random.normal(k2, (3 * hidden_size, hidden_size), jnp.float32),
        "b_ih": scale * jax.random.normal(k3, (3 * hidden_size,), jnp.float32),
        "b_hh": scale * jax.random.normal(k4, (3 * hidden_size,), jnp.float32),
    }


if __name__ == "__main__":
    vocab_size, embed_size, hidden_size = 20, 16, 32
    batch_size, seq_len = 2, 8

    key = jax.random.PRNGKey(0)
    kp, ki = jax.random.split(key)
    params = init_params(kp, vocab_size, embed_size, hidden_size)

    inputs = jax.random.randint(ki, (batch_size, seq_len), 0, vocab_size, dtype=jnp.int32)
    hidden = jnp.zeros((1, batch_size, hidden_size), jnp.float32)   # init_hidden()

    fwd = jax.jit(functools.partial(encoder_forward, t_chunk=4))
    output, h_n = fwd(inputs, hidden, params)
    output = jax.block_until_ready(output)
    h_n = jax.block_until_ready(h_n)

    ref_out, ref_h = reference_forward(inputs, hidden, params)
    assert output.shape == (batch_size, seq_len, hidden_size)
    assert h_n.shape == (1, batch_size, hidden_size)
    # bf16 MXU inputs (f32 accumulation/carry) -> loosened tolerance vs f32 ref
    assert jnp.allclose(output, ref_out, atol=2e-2, rtol=2e-2)
    assert jnp.allclose(h_n, ref_h, atol=2e-2, rtol=2e-2)

    print("KERNEL_OK")
</pallas_src>

<mosaic_0001>
module attributes {stable_mosaic.version = 11 : i64} {
  func.func @_proj_kernel(%arg0: i32, %arg1: memref<32x16xbf16, #tpu.memory_space<vmem>>, %arg2: memref<16x384xbf16, #tpu.memory_space<vmem>>, %arg3: memref<1x384xf32, #tpu.memory_space<vmem>>, %arg4: memref<32x384xf32, #tpu.memory_space<vmem>>) attributes {dimension_semantics = [#tpu.dimension_semantics<parallel>], iteration_bounds = array<i64: 2>, scalar_prefetch = 0 : i64, scratch_operands = 0 : i64, tpu.core_type = #tpu.core_type<tc>, window_params = [{transform_indices = @transform_0, window_bounds = array<i64: 32, 16>}, {pipeline_mode = #tpu.pipeline_mode<synchronous>, transform_indices = @transform_1, window_bounds = array<i64: 16, 384>}, {pipeline_mode = #tpu.pipeline_mode<synchronous>, transform_indices = @transform_2, window_bounds = array<i64: 1, 384>}, {transform_indices = @transform_3, window_bounds = array<i64: 32, 384>}]} {
    %c0 = arith.constant 0 : index
    %c0_0 = arith.constant 0 : index
    %0 = vector.load %arg1[%c0, %c0_0] : memref<32x16xbf16, #tpu.memory_space<vmem>>, vector<32x16xbf16>
    %c0_1 = arith.constant 0 : index
    %c0_2 = arith.constant 0 : index
    %1 = vector.load %arg2[%c0_1, %c0_2] : memref<16x384xbf16, #tpu.memory_space<vmem>>, vector<16x384xbf16>
    %cst = arith.constant dense<0.000000e+00> : vector<32x384xf32>
    %2 = tpu.matmul %0, %1, %cst {dimension_numbers = #tpu.dot_dimension_numbers<[1], [0], [0], [1], [0, 0, 1, 1], [], []>} : vector<32x16xbf16>, vector<16x384xbf16>, vector<32x384xf32> -> vector<32x384xf32>
    %c0_3 = arith.constant 0 : index
    %c0_4 = arith.constant 0 : index
    %3 = vector.load %arg3[%c0_3, %c0_4] : memref<1x384xf32, #tpu.memory_space<vmem>>, vector<1x384xf32>
    %4 = vector.broadcast %3 : vector<1x384xf32> to vector<32x384xf32>
    %5 = arith.addf %2, %4 : vector<32x384xf32>
    %c0_5 = arith.constant 0 : index
    %c0_6 = arith.constant 0 : index
    %6 = vector.load %arg4[%c0_5, %c0_6] : memref<32x384xf32, #tpu.memory_space<vmem>>, vector<32x384xf32>
    tpu.vector_store %arg4[%c0_5, %c0_6], %5 {strides = array<i32>} : memref<32x384xf32, #tpu.memory_space<vmem>>, vector<32x384xf32>,
    return
  }
  func.func @transform_0(%arg0: i32) -> (i32, i32) {
    %c0_i32 = arith.constant 0 : i32
    %c0_i32_0 = arith.constant 0 : i32
    return %arg0, %c0_i32 : i32, i32
  }
  func.func @transform_1(%arg0: i32) -> (i32, i32) {
    %c0_i32 = arith.constant 0 : i32
    %c0_i32_0 = arith.constant 0 : i32
    %c0_i32_1 = arith.constant 0 : i32
    return %c0_i32, %c0_i32_0 : i32, i32
  }
  func.func @transform_2(%arg0: i32) -> (i32, i32) {
    %c0_i32 = arith.constant 0 : i32
    %c0_i32_0 = arith.constant 0 : i32
    %c0_i32_1 = arith.constant 0 : i32
    return %c0_i32, %c0_i32_0 : i32, i32
  }
  func.func @transform_3(%arg0: i32) -> (i32, i32) {
    %c0_i32 = arith.constant 0 : i32
    %c0_i32_0 = arith.constant 0 : i32
    return %arg0, %c0_i32 : i32, i32
  }
}

module attributes {stable_mosaic.version = 11 : i64} {
  func.func @_gru_kernel(%arg0: i32, %arg1: memref<4x8x384xf32, #tpu.memory_space<vmem>>, %arg2: memref<8x128xf32, #tpu.memory_space<vmem>>, %arg3: memref<128x384xbf16, #tpu.memory_space<vmem>>, %arg4: memref<8x384xf32, #tpu.memory_space<vmem>>, %arg5: memref<4x8x128xf32, #tpu.memory_space<vmem>>, %arg6: memref<8x128xf32, #tpu.memory_space<vmem>>) attributes {dimension_semantics = [#tpu.dimension_semantics<arbitrary>], iteration_bounds = array<i64: 2>, scalar_prefetch = 0 : i64, scratch_operands = 1 : i64, tpu.core_type = #tpu.core_type<tc>, window_params = [{transform_indices = @transform_0, window_bounds = array<i64: 4, 8, 384>}, {pipeline_mode = #tpu.pipeline_mode<synchronous>, transform_indices = @transform_1, window_bounds = array<i64: 8, 128>}, {pipeline_mode = #tpu.pipeline_mode<synchronous>, transform_indices = @transform_2, window_bounds = array<i64: 128, 384>}, {pipeline_mode = #tpu.pipeline_mode<synchronous>, transform_indices = @transform_3, window_bounds = array<i64: 8, 384>}, {transform_indices = @transform_4, window_bounds = array<i64: 4, 8, 128>}]} {
    %c0_i32 = arith.constant 0 : i32
    %0 = arith.cmpi eq, %arg0, %c0_i32 : i32
    %1 = arith.extui %0 : i1 to i32
    %c0_i32_0 = arith.constant 0 : i32
    %2 = arith.cmpi ne, %1, %c0_i32_0 : i32
    scf.if %2 {
      %c0_46 = arith.constant 0 : index
      %c0_47 = arith.constant 0 : index
      %154 = vector.load %arg2[%c0_46, %c0_47] : memref<8x128xf32, #tpu.memory_space<vmem>>, vector<8x128xf32>
      %c0_48 = arith.constant 0 : index
      %c0_49 = arith.constant 0 : index
      %155 = vector.load %arg6[%c0_48, %c0_49] : memref<8x128xf32, #tpu.memory_space<vmem>>, vector<8x128xf32>
      tpu.vector_store %arg6[%c0_48, %c0_49], %154 {strides = array<i32>} : memref<8x128xf32, #tpu.memory_space<vmem>>, vector<8x128xf32>,
    } else {
    }
    %c0 = arith.constant 0 : index
    %c0_1 = arith.constant 0 : index
    %3 = vector.load %arg4[%c0, %c0_1] : memref<8x384xf32, #tpu.memory_space<vmem>>, vector<8x384xf32>
    %c0_2 = arith.constant 0 : index
    %c0_3 = arith.constant 0 : index
    %4 = vector.load %arg6[%c0_2, %c0_3] : memref<8x128xf32, #tpu.memory_space<vmem>>, vector<8x128xf32>
    %c0_i32_4 = arith.constant 0 : i32
    %5 = arith.index_cast %c0_i32_4 : i32 to index
    %c0_5 = arith.constant 0 : index
    %c0_6 = arith.constant 0 : index
    %6 = vector.load %arg1[%5, %c0_5, %c0_6] : memref<4x8x384xf32, #tpu.memory_space<vmem>>, vector<1x8x384xf32>
    %7 = vector.shape_cast %6 : vector<1x8x384xf32> to vector<8x384xf32>
    %8 = arith.truncf %4 : vector<8x128xf32> to vector<8x128xbf16>
    %c0_7 = arith.constant 0 : index
    %c0_8 = arith.constant 0 : index
    %9 = vector.load %arg3[%c0_7, %c0_8] : memref<128x384xbf16, #tpu.memory_space<vmem>>, vector<128x384xbf16>
    %cst = arith.constant dense<0.000000e+00> : vector<8x384xf32>
    %10 = tpu.matmul %8, %9, %cst {dimension_numbers = #tpu.dot_dimension_numbers<[1], [0], [0], [1], [0, 0, 1, 1], [], []>} : vector<8x128xbf16>, vector<128x384xbf16>, vector<8x384xf32> -> vector<8x384xf32>
    %11 = arith.addf %10, %3 : vector<8x384xf32>
    %12 = vector.extract_strided_slice %7 {offsets = [0, 0], sizes = [8, 128], strides = [1, 1]} : vector<8x384xf32> to vector<8x128xf32>
    %13 = vector.extract_strided_slice %11 {offsets = [0, 0], sizes = [8, 128], strides = [1, 1]} : vector<8x384xf32> to vector<8x128xf32>
    %14 = arith.addf %12, %13 : vector<8x128xf32>
    %15 = arith.negf %14 : vector<8x128xf32>
    %16 = math.exp %15 : vector<8x128xf32>
    %cst_9 = arith.constant 1.000000e+00 : f32
    %17 = vector.broadcast %cst_9 : f32 to vector<8x128xf32>
    %18 = arith.addf %17, %16 : vector<8x128xf32>
    %19 = arith.divf %17, %18 : vector<8x128xf32>
    %20 = vector.extract_strided_slice %7 {offsets = [0, 128], sizes = [8, 128], strides = [1, 1]} : vector<8x384xf32> to vector<8x128xf32>
    %21 = vector.extract_strided_slice %11 {offsets = [0, 128], sizes = [8, 128], strides = [1, 1]} : vector<8x384xf32> to vector<8x128xf32>
    %22 = arith.addf %20, %21 : vector<8x128xf32>
    %23 = arith.negf %22 : vector<8x128xf32>
    %24 = math.exp %23 : vector<8x128xf32>
    %cst_10 = arith.constant 1.000000e+00 : f32
    %25 = vector.broadcast %cst_10 : f32 to vector<8x128xf32>
    %26 = arith.addf %25, %24 : vector<8x128xf32>
    %27 = arith.divf %25, %26 : vector<8x128xf32>
    %28 = vector.extract_strided_slice %7 {offsets = [0, 256], sizes = [8, 128], strides = [1, 1]} : vector<8x384xf32> to vector<8x128xf32>
    %29 = vector.extract_strided_slice %11 {offsets = [0, 256], sizes = [8, 128], strides = [1, 1]} : vector<8x384xf32> to vector<8x128xf32>
    %30 = arith.mulf %19, %29 : vector<8x128xf32>
    %31 = arith.addf %28, %30 : vector<8x128xf32>
    %32 = math.tanh %31 : vector<8x128xf32>
    %cst_11 = arith.constant 1.000000e+00 : f32
    %33 = vector.broadcast %cst_11 : f32 to vector<8x128xf32>
    %34 = arith.subf %33, %27 : vector<8x128xf32>
    %35 = arith.mulf %34, %32 : vector<8x128xf32>
    %36 = arith.mulf %27, %4 : vector<8x128xf32>
    %37 = arith.addf %35, %36 : vector<8x128xf32>
    %38 = arith.index_cast %c0_i32_4 : i32 to index
    %c0_12 = arith.constant 0 : index
    %c0_13 = arith.constant 0 : index
    %39 = vector.load %arg5[%38, %c0_12, %c0_13] : memref<4x8x128xf32, #tpu.memory_space<vmem>>, vector<1x8x128xf32>
    %40 = vector.shape_cast %39 : vector<1x8x128xf32> to vector<8x128xf32>
    %41 = vector.shape_cast %37 : vector<8x128xf32> to vector<1x8x128xf32>
    tpu.vector_store %arg5[%38, %c0_12, %c0_13], %41 {strides = array<i32>} : memref<4x8x128xf32, #tpu.memory_space<vmem>>, vector<1x8x128xf32>,
    %c1_i32 = arith.constant 1 : i32
    %42 = arith.index_cast %c1_i32 : i32 to index
    %c0_14 = arith.constant 0 : index
    %c0_15 = arith.constant 0 : index
    %43 = vector.load %arg1[%42, %c0_14, %c0_15] : memref<4x8x384xf32, #tpu.memory_space<vmem>>, vector<1x8x384xf32>
    %44 = vector.shape_cast %43 : vector<1x8x384xf32> to vector<8x384xf32>
    %45 = arith.truncf %37 : vector<8x128xf32> to vector<8x128xbf16>
    %c0_16 = arith.constant 0 : index
    %c0_17 = arith.constant 0 : index
    %46 = vector.load %arg3[%c0_16, %c0_17] : memref<128x384xbf16, #tpu.memory_space<vmem>>, vector<128x384xbf16>
    %cst_18 = arith.constant dense<0.000000e+00> : vector<8x384xf32>
    %47 = tpu.matmul %45, %46, %cst_18 {dimension_numbers = #tpu.dot_dimension_numbers<[1], [0], [0], [1], [0, 0, 1, 1], [], []>} : vector<8x128xbf16>, vector<128x384xbf16>, vector<8x384xf32> -> vector<8x384xf32>
    %48 = arith.addf %47, %3 : vector<8x384xf32>
    %49 = vector.extract_strided_slice %44 {offsets = [0, 0], sizes = [8, 128], strides = [1, 1]} : vector<8x384xf32> to vector<8x128xf32>
    %50 = vector.extract_strided_slice %48 {offsets = [0, 0], sizes = [8, 128], strides = [1, 1]} : vector<8x384xf32> to vector<8x128xf32>
    %51 = arith.addf %49, %50 : vector<8x128xf32>
    %52 = arith.negf %51 : vector<8x128xf32>
    %53 = math.exp %52 : vector<8x128xf32>
    %cst_19 = arith.constant 1.000000e+00 : f32
    %54 = vector.broadcast %cst_19 : f32 to vector<8x128xf32>
    %55 = arith.addf %54, %53 : vector<8x128xf32>
    %56 = arith.divf %54, %55 : vector<8x128xf32>
    %57 = vector.extract_strided_slice %44 {offsets = [0, 128], sizes = [8, 128], strides = [1, 1]} : vector<8x384xf32> to vector<8x128xf32>
    %58 = vector.extract_strided_slice %48 {offsets = [0, 128], sizes = [8, 128], strides = [1, 1]} : vector<8x384xf32> to vector<8x128xf32>
    %59 = arith.addf %57, %58 : vector<8x128xf32>
    %60 = arith.negf %59 : vector<8x128xf32>
    %61 = math.exp %60 : vector<8x128xf32>
    %cst_20 = arith.constant 1.000000e+00 : f32
    %62 = vector.broadcast %cst_20 : f32 to vector<8x128xf32>
    %63 = arith.addf %62, %61 : vector<8x128xf32>
    %64 = arith.divf %62, %63 : vector<8x128xf32>
    %65 = vector.extract_strided_slice %44 {offsets = [0, 256], sizes = [8, 128], strides = [1, 1]} : vector<8x384xf32> to vector<8x128xf32>
    %66 = vector.extract_strided_slice %48 {offsets = [0, 256], sizes = [8, 128], strides = [1, 1]} : vector<8x384xf32> to vector<8x128xf32>
    %67 = arith.mulf %56, %66 : vector<8x128xf32>
    %68 = arith.addf %65, %67 : vector<8x128xf32>
    %69 = math.tanh %68 : vector<8x128xf32>
    %cst_21 = arith.constant 1.000000e+00 : f32
    %70 = vector.broadcast %cst_21 : f32 to vector<8x128xf32>
    %71 = arith.subf %70, %64 : vector<8x128xf32>
    %72 = arith.mulf %71, %69 : vector<8x128xf32>
    %73 = arith.mulf %64, %37 : vector<8x128xf32>
    %74 = arith.addf %72, %73 : vector<8x128xf32>
    %75 = arith.index_cast %c1_i32 : i32 to index
    %c0_22 = arith.constant 0 : index
    %c0_23 = arith.constant 0 : index
    %76 = vector.load %arg5[%75, %c0_22, %c0_23] : memref<4x8x128xf32, #tpu.memory_space<vmem>>, vector<1x8x128xf32>
    %77 = vector.shape_cast %76 : vector<1x8x128xf32> to vector<8x128xf32>
    %78 = vector.shape_cast %74 : vector<8x128xf32> to vector<1x8x128xf32>
    tpu.vector_store %arg5[%75, %c0_22, %c0_23], %78 {strides = array<i32>} : memref<4x8x128xf32, #tpu.memory_space<vmem>>, vector<1x8x128xf32>,
    %c2_i32 = arith.constant 2 : i32
    %79 = arith.index_cast %c2_i32 : i32 to index
    %c0_24 = arith.constant 0 : index
    %c0_25 = arith.constant 0 : index
    %80 = vector.load %arg1[%79, %c0_24, %c0_25] : memref<4x8x384xf32, #tpu.memory_space<vmem>>, vector<1x8x384xf32>
    %81 = vector.shape_cast %80 : vector<1x8x384xf32> to vector<8x384xf32>
    %82 = arith.truncf %74 : vector<8x128xf32> to vector<8x128xbf16>
    %c0_26 = arith.constant 0 : index
    %c0_27 = arith.constant 0 : index
    %83 = vector.load %arg3[%c0_26, %c0_27] : memref<128x384xbf16, #tpu.memory_space<vmem>>, vector<128x384xbf16>
    %cst_28 = arith.constant dense<0.000000e+00> : vector<8x384xf32>
    %84 = tpu.matmul %82, %83, %cst_28 {dimension_numbers = #tpu.dot_dimension_numbers<[1], [0], [0], [1], [0, 0, 1, 1], [], []>} : vector<8x128xbf16>, vector<128x384xbf16>, vector<8x384xf32> -> vector<8x384xf32>
    %85 = arith.addf %84, %3 : vector<8x384xf32>
    %86 = vector.extract_strided_slice %81 {offsets = [0, 0], sizes = [8, 128], strides = [1, 1]} : vector<8x384xf32> to vector<8x128xf32>
    %87 = vector.extract_strided_slice %85 {offsets = [0, 0], sizes = [8, 128], strides = [1, 1]} : vector<8x384xf32> to vector<8x128xf32>
    %88 = arith.addf %86, %87 : vector<8x128xf32>
    %89 = arith.negf %88 : vector<8x128xf32>
    %90 = math.exp %89 : vector<8x128xf32>
    %cst_29 = arith.constant 1.000000e+00 : f32
    %91 = vector.broadcast %cst_29 : f32 to vector<8x128xf32>
    %92 = arith.addf %91, %90 : vector<8x128xf32>
    %93 = arith.divf %91, %92 : vector<8x128xf32>
    %94 = vector.extract_strided_slice %81 {offsets = [0, 128], sizes = [8, 128], strides = [1, 1]} : vector<8x384xf32> to vector<8x128xf32>
    %95 = vector.extract_strided_slice %85 {offsets = [0, 128], sizes = [8, 128], strides = [1, 1]} : vector<8x384xf32> to vector<8x128xf32>
    %96 = arith.addf %94, %95 : vector<8x128xf32>
    %97 = arith.negf %96 : vector<8x128xf32>
    %98 = math.exp %97 : vector<8x128xf32>
    %cst_30 = arith.constant 1.000000e+00 : f32
    %99 = vector.broadcast %cst_30 : f32 to vector<8x128xf32>
    %100 = arith.addf %99, %98 : vector<8x128xf32>
    %101 = arith.divf %99, %100 : vector<8x128xf32>
    %102 = vector.extract_strided_slice %81 {offsets = [0, 256], sizes = [8, 128], strides = [1, 1]} : vector<8x384xf32> to vector<8x128xf32>
    %103 = vector.extract_strided_slice %85 {offsets = [0, 256], sizes = [8, 128], strides = [1, 1]} : vector<8x384xf32> to vector<8x128xf32>
    %104 = arith.mulf %93, %103 : vector<8x128xf32>
    %105 = arith.addf %102, %104 : vector<8x128xf32>
    %106 = math.tanh %105 : vector<8x128xf32>
    %cst_31 = arith.constant 1.000000e+00 : f32
    %107 = vector.broadcast %cst_31 : f32 to vector<8x128xf32>
    %108 = arith.subf %107, %101 : vector<8x128xf32>
    %109 = arith.mulf %108, %106 : vector<8x128xf32>
    %110 = arith.mulf %101, %74 : vector<8x128xf32>
    %111 = arith.addf %109, %110 : vector<8x128xf32>
    %112 = arith.index_cast %c2_i32 : i32 to index
    %c0_32 = arith.constant 0 : index
    %c0_33 = arith.constant 0 : index
    %113 = vector.load %arg5[%112, %c0_32, %c0_33] : memref<4x8x128xf32, #tpu.memory_space<vmem>>, vector<1x8x128xf32>
    %114 = vector.shape_cast %113 : vector<1x8x128xf32> to vector<8x128xf32>
    %115 = vector.shape_cast %111 : vector<8x128xf32> to vector<1x8x128xf32>
    tpu.vector_store %arg5[%112, %c0_32, %c0_33], %115 {strides = array<i32>} : memref<4x8x128xf32, #tpu.memory_space<vmem>>, vector<1x8x128xf32>,
    %c3_i32 = arith.constant 3 : i32
    %116 = arith.index_cast %c3_i32 : i32 to index
    %c0_34 = arith.constant 0 : index
    %c0_35 = arith.constant 0 : index
    %117 = vector.load %arg1[%116, %c0_34, %c0_35] : memref<4x8x384xf32, #tpu.memory_space<vmem>>, vector<1x8x384xf32>
    %118 = vector.shape_cast %117 : vector<1x8x384xf32> to vector<8x384xf32>
    %119 = arith.truncf %111 : vector<8x128xf32> to vector<8x128xbf16>
    %c0_36 = arith.constant 0 : index
    %c0_37 = arith.constant 0 : index
    %120 = vector.load %arg3[%c0_36, %c0_37] : memref<128x384xbf16, #tpu.memory_space<vmem>>, vector<128x384xbf16>
    %cst_38 = arith.constant dense<0.000000e+00> : vector<8x384xf32>
    %121 = tpu.matmul %119, %120, %cst_38 {dimension_numbers = #tpu.dot_dimension_numbers<[1], [0], [0], [1], [0, 0, 1, 1], [], []>} : vector<8x128xbf16>, vector<128x384xbf16>, vector<8x384xf32> -> vector<8x384xf32>
    %122 = arith.addf %121, %3 : vector<8x384xf32>
    %123 = vector.extract_strided_slice %118 {offsets = [0, 0], sizes = [8, 128], strides = [1, 1]} : vector<8x384xf32> to vector<8x128xf32>
    %124 = vector.extract_strided_slice %122 {offsets = [0, 0], sizes = [8, 128], strides = [1, 1]} : vector<8x384xf32> to vector<8x128xf32>
    %125 = arith.addf %123, %124 : vector<8x128xf32>
    %126 = arith.negf %125 : vector<8x128xf32>
    %127 = math.exp %126 : vector<8x128xf32>
    %cst_39 = arith.constant 1.000000e+00 : f32
    %128 = vector.broadcast %cst_39 : f32 to vector<8x128xf32>
    %129 = arith.addf %128, %127 : vector<8x128xf32>
    %130 = arith.divf %128, %129 : vector<8x128xf32>
    %131 = vector.extract_strided_slice %118 {offsets = [0, 128], sizes = [8, 128], strides = [1, 1]} : vector<8x384xf32> to vector<8x128xf32>
    %132 = vector.extract_strided_slice %122 {offsets = [0, 128], sizes = [8, 128], strides = [1, 1]} : vector<8x384xf32> to vector<8x128xf32>
    %133 = arith.addf %131, %132 : vector<8x128xf32>
    %134 = arith.negf %133 : vector<8x128xf32>
    %135 = math.exp %134 : vector<8x128xf32>
    %cst_40 = arith.constant 1.000000e+00 : f32
    %136 = vector.broadcast %cst_40 : f32 to vector<8x128xf32>
    %137 = arith.addf %136, %135 : vector<8x128xf32>
    %138 = arith.divf %136, %137 : vector<8x128xf32>
    %139 = vector.extract_strided_slice %118 {offsets = [0, 256], sizes = [8, 128], strides = [1, 1]} : vector<8x384xf32> to vector<8x128xf32>
    %140 = vector.extract_strided_slice %122 {offsets = [0, 256], sizes = [8, 128], strides = [1, 1]} : vector<8x384xf32> to vector<8x128xf32>
    %141 = arith.mulf %130, %140 : vector<8x128xf32>
    %142 = arith.addf %139, %141 : vector<8x128xf32>
    %143 = math.tanh %142 : vector<8x128xf32>
    %cst_41 = arith.constant 1.000000e+00 : f32
    %144 = vector.broadcast %cst_41 : f32 to vector<8x128xf32>
    %145 = arith.subf %144, %138 : vector<8x128xf32>
    %146 = arith.mulf %145, %143 : vector<8x128xf32>
    %147 = arith.mulf %138, %111 : vector<8x128xf32>
    %148 = arith.addf %146, %147 : vector<8x128xf32>
    %149 = arith.index_cast %c3_i32 : i32 to index
    %c0_42 = arith.constant 0 : index
    %c0_43 = arith.constant 0 : index
    %150 = vector.load %arg5[%149, %c0_42, %c0_43] : memref<4x8x128xf32, #tpu.memory_space<vmem>>, vector<1x8x128xf32>
    %151 = vector.shape_cast %150 : vector<1x8x128xf32> to vector<8x128xf32>
    %152 = vector.shape_cast %148 : vector<8x128xf32> to vector<1x8x128xf32>
    tpu.vector_store %arg5[%149, %c0_42, %c0_43], %152 {strides = array<i32>} : memref<4x8x128xf32, #tpu.memory_space<vmem>>, vector<1x8x128xf32>,
    %c4_i32 = arith.constant 4 : i32
    %c0_44 = arith.constant 0 : index
    %c0_45 = arith.constant 0 : index
    %153 = vector.load %arg6[%c0_44, %c0_45] : memref<8x128xf32, #tpu.memory_space<vmem>>, vector<8x128xf32>
    tpu.vector_store %arg6[%c0_44, %c0_45], %148 {strides = array<i32>} : memref<8x128xf32, #tpu.memory_space<vmem>>, vector<8x128xf32>,
    return
  }
  func.func @transform_0(%arg0: i32) -> (i32, i32, i32) {
    %c0_i32 = arith.constant 0 : i32
    %c0_i32_0 = arith.constant 0 : i32
    %c0_i32_1 = arith.constant 0 : i32
    return %arg0, %c0_i32, %c0_i32_0 : i32, i32, i32
  }
  func.func @transform_1(%arg0: i32) -> (i32, i32) {
    %c0_i32 = arith.constant 0 : i32
    %c0_i32_0 = arith.constant 0 : i32
    %c0_i32_1 = arith.constant 0 : i32
    return %c0_i32, %c0_i32_0 : i32, i32
  }
  func.func @transform_2(%arg0: i32) -> (i32, i32) {
    %c0_i32 = arith.constant 0 : i32
    %c0_i32_0 = arith.constant 0 : i32
    %c0_i32_1 = arith.constant 0 : i32
    return %c0_i32, %c0_i32_0 : i32, i32
  }
  func.func @transform_3(%arg0: i32) -> (i32, i32) {
    %c0_i32 = arith.constant 0 : i32
    %c0_i32_0 = arith.constant 0 : i32
    %c0_i32_1 = arith.constant 0 : i32
    return %c0_i32, %c0_i32_0 : i32, i32
  }
  func.func @transform_4(%arg0: i32) -> (i32, i32, i32) {
    %c0_i32 = arith.constant 0 : i32
    %c0_i32_0 = arith.constant 0 : i32
    %c0_i32_1 = arith.constant 0 : i32
    return %arg0, %c0_i32, %c0_i32_0 : i32, i32, i32
  }
}

</mosaic_0001>

<llo_original>
// kernel: encoder_forward.2
$region0: #{encoder_forward.2}
  #allocation0 [shape = 'u32[]', space=smem, size = 0x4, offset = 0x4, fixed_abs, tag = 'smem constant byte address 0x4 - core index']
  #allocation1 [shape = 'u32[144,128]{1,0:T(1,128)}', space=vmem, size = 0x12000, scoped, tag = 'internal scratch']
  %s0 = inlined_call_operand.vmem [shape: bf16[64,16], index: 0, kind: input, shape index: {}]
  %s1 = inlined_call_operand.vmem [shape: bf16[16,384], index: 1, kind: input, shape index: {}]
  %s2 = inlined_call_operand.vmem [shape: f32[1,384], index: 2, kind: input, shape index: {}]
  %s3 = inlined_call_operand.vmem [shape: f32[64,384], index: 3, kind: output, shape index: {}]
  %s4 = sld [smem:[#allocation0]]
  $region45: #{encoder_forward.2} parent=0
    _
  %s6 = ssub.s32 1, %s4
  %s7 = scalar_select 0, %s6, %s4
  loop: start=0, step=1, limit=4
  $region2: #{encoder_forward.2} parent=0 // loop_pre_header
    _
  $region3: #{encoder_forward.2} parent=0 // loop_header
    %s9 = sphi 0, %s13
    %p10 = scmp.ge.s32.totalorder %s9, 4
    %s19 = sphi 0, %s21
    %s22 = sphi 0, %s19
    %s23 = sphi 0, %s22
    %s39 = sphi 0, %s23
    %s43 = sphi 0, %s43
    %s45 = sphi 0, %s43
    %s46 = sphi 0, %s45
    %s60 = sphi 0, %s46
    %s64 = sphi 0, %s64
    %s66 = sphi 0, %s64
    %s67 = sphi 0, %s66
    %s81 = sphi 0, %s67
    %s87 = sphi 0, %s89
    %s90 = sphi 0, %s87
    %s91 = sphi 0, %s90
    %s107 = sphi 0, %s91
  $region4: #{encoder_forward.2} parent=0 // loop_header_branch
    %12 = sbr.rel (%p10) target = $region8
  $region5: #{encoder_forward.2} parent=0 // loop_body
    %s14 = ssub.s32 %s9, 1
    %s15 = ssub.s32 %s9, 2
    %s16 = sadd.s32 %s9, 1
    %s17 = ssub.s32 %s9, %s16
    %p18 = scmp.eq.s32.totalorder %s17, 0
    %s20 = sadd.s32 %s19, 1
    %s21 = scalar_select %p18, %s19, %s20
    %p24 = pneg %p18
    %p25 = scmp.eq.s32.totalorder %s9, 1
    %p26 = por %p24, %p25
    %p27 = scmp.ne.s32.totalorder %s19, %s22
    %p28 = scmp.eq.s32.totalorder %s9, 0
    %p29 = por %p27, %p28
    %p30 = scmp.ne.s32.totalorder %s19, %s22
    %p31 = scmp.eq.s32.totalorder %s14, 1
    %p32 = por %p30, %p31
    %p33 = scmp.ne.s32.totalorder %s22, %s23
    %p34 = scmp.eq.s32.totalorder %s14, 0
    %p35 = por %p33, %p34
    %p36 = scmp.ne.s32.totalorder %s22, %s23
    %p37 = scmp.eq.s32.totalorder %s15, 1
    %p38 = por %p36, %p37
    %p40 = scmp.ne.s32.totalorder %s23, %s39
    %p41 = scmp.eq.s32.totalorder %s15, 0
    %p42 = por %p40, %p41
    %s44 = sadd.s32 %s43, 1
    %p47 = scmp.eq.s32.totalorder %s9, 1
    %p48 = scmp.ne.s32.totalorder %s43, %s45
    %p49 = scmp.eq.s32.totalorder %s9, 0
    %p50 = por %p48, %p49
    %p51 = scmp.ne.s32.totalorder %s43, %s45
    %p52 = scmp.eq.s32.totalorder %s14, 1
    %p53 = por %p51, %p52
    %p54 = scmp.ne.s32.totalorder %s45, %s46
    %p55 = scmp.eq.s32.totalorder %s14, 0
    %p56 = por %p54, %p55
    %p57 = scmp.ne.s32.totalorder %s45, %s46
    %p58 = scmp.eq.s32.totalorder %s15, 1
    %p59 = por %p57, %p58
    %p61 = scmp.ne.s32.totalorder %s46, %s60
    %p62 = scmp.eq.s32.totalorder %s15, 0
    %p63 = por %p61, %p62
    %s65 = sadd.s32 %s64, 1
    %p68 = scmp.eq.s32.totalorder %s9, 1
    %p69 = scmp.ne.s32.totalorder %s64, %s66
    %p70 = scmp.eq.s32.totalorder %s9, 0
    %p71 = por %p69, %p70
    %p72 = scmp.ne.s32.totalorder %s64, %s66
    %p73 = scmp.eq.s32.totalorder %s14, 1
    %p74 = por %p72, %p73
    %p75 = scmp.ne.s32.totalorder %s66, %s67
    %p76 = scmp.eq.s32.totalorder %s14, 0
    %p77 = por %p75, %p76
    %p78 = scmp.ne.s32.totalorder %s66, %s67
    %p79 = scmp.eq.s32.totalorder %s15, 1
    %p80 = por %p78, %p79
    %p82 = scmp.ne.s32.totalorder %s67, %s81
    %p83 = scmp.eq.s32.totalorder %s15, 0
    %p84 = por %p82, %p83
    %s85 = ssub.s32 %s9, %s16
    %p86 = scmp.eq.s32.totalorder %s85, 0
    %s88 = sadd.s32 %s87, 1
    %s89 = scalar_select %p86, %s87, %s88
    %p92 = pneg %p86
    %p93 = scmp.eq.s32.totalorder %s9, 1
    %p94 = por %p92, %p93
    %p95 = scmp.ne.s32.totalorder %s87, %s90
    %p96 = scmp.eq.s32.totalorder %s9, 0
    %p97 = por %p95, %p96
    %p98 = scmp.ne.s32.totalorder %s87, %s90
    %p99 = scmp.eq.s32.totalorder %s14, 1
    %p100 = por %p98, %p99
    %p101 = scmp.ne.s32.totalorder %s90, %s91
    %p102 = scmp.eq.s32.totalorder %s14, 0
    %p103 = por %p101, %p102
    %p104 = scmp.ne.s32.totalorder %s90, %s91
    %p105 = scmp.eq.s32.totalorder %s15, 1
    %p106 = por %p104, %p105
    %p108 = scmp.ne.s32.totalorder %s91, %s107
    %p109 = scmp.eq.s32.totalorder %s15, 0
    %p110 = por %p108, %p109
    %p111 = scmp.le.s32.totalorder 1, %s9
    %p112 = scmp.lt.s32.totalorder %s9, 3
    %p113 = pnand %p111, %p112
    %p114 = pneg %p113
    // Predicated region
    $region9: #{encoder_forward.2} parent=5 // pred_check
      _
    $region10: #{encoder_forward.2} parent=5 // pred_check_branch
      %116 = sbr.rel (%p113) target = $region12
    $region11: #{encoder_forward.2} parent=5 // pred_region
      %s117 = ssub.s32 %s9, 1
      // Predicated region
      $region13: #{encoder_forward.2} parent=11 // pred_check
        %p118 = pneg %p56
      $region14: #{encoder_forward.2} parent=11 // pred_check_branch
        %120 = sbr.rel (%p118) target = $region16
      $region15: #{encoder_forward.2} parent=11 // pred_region
        _
      $region16: #{encoder_forward.2} parent=11 // pred_fallthru
        _
      // Predicated region
      $region17: #{encoder_forward.2} parent=11 // pred_check
        %p121 = pneg %p77
      $region18: #{encoder_forward.2} parent=11 // pred_check_branch
        %123 = sbr.rel (%p121) target = $region20
      $region19: #{encoder_forward.2} parent=11 // pred_region
        _
      $region20: #{encoder_forward.2} parent=11 // pred_fallthru
        _
    $region12: #{encoder_forward.2} parent=5 // pred_fallthru
      _
    %p124 = scmp.lt.s32.totalorder %s9, 2
    // Predicated region
    $region21: #{encoder_forward.2} parent=5 // pred_check
      %p125 = pneg %p124
    $region22: #{encoder_forward.2} parent=5 // pred_check_branch
      %127 = sbr.rel (%p125) target = $region24
    $region23: #{encoder_forward.2} parent=5 // pred_region
      // Predicated region
      $region25: #{encoder_forward.2} parent=23 // pred_check
        %p128 = pneg %p29
      $region26: #{encoder_forward.2} parent=23 // pred_check_branch
        %130 = sbr.rel (%p128) target = $region28
      $region27: #{encoder_forward.2} parent=23 // pred_region
        %s131 = smul.u32 4, %s9
        %p132 = scmp.lt.s32.totalorder %s131, 7
        %s133 = scalar_select %p132, %s131, 7
        %s134 = smul.addr %s133, 4
        %s135 = scalar_lea.vmem %s0, %s134
        %s136 = smul.u32 4, %s9
      $region28: #{encoder_forward.2} parent=23 // pred_fallthru
        _
    $region24: #{encoder_forward.2} parent=5 // pred_fallthru
      _
    %p137 = scmp.le.s32.totalorder 1, %s9
    %p138 = scmp.lt.s32.totalorder %s9, 3
    %p139 = pnand %p137, %p138
    %p140 = pneg %p139
    // Predicated region
    $region29: #{encoder_forward.2} parent=5 // pred_check
      _
    $region30: #{encoder_forward.2} parent=5 // pred_check_branch
      %142 = sbr.rel (%p139) target = $region32
    $region31: #{encoder_forward.2} parent=5 // pred_region
      %s143 = ssub.s32 %s9, 1
      %s144 = smul.u32 4, %s14
      %p145 = scmp.lt.s32.totalorder %s144, 7
      %s146 = scalar_select %p145, %s144, 7
      %s147 = smul.addr %s146, 4
      %s148 = scalar_lea.vmem %s0, %s147
      %p149 = pneg %p35
      %p150 = pneg %p32
      %p151 = pneg %p56
      %p152 = pneg %p53
      %p153 = pneg %p77
      %p154 = pneg %p74
      %p155 = pneg %p103
      %p156 = pneg %p100
      %s157 = smul.u32 4, %s14
      %p158 = scmp.lt.s32.totalorder %s157, 7
      %s159 = scalar_select %p158, %s157, 7
      %s160 = smul.addr %s159, 3
      %s161 = smul.addr %s160, 8
      %s162 = scalar_lea.vmem %s3, %s161
      %s163 = smul.u32 4, %s14
      %p164 = scmp.lt.s32.totalorder %s163, 7
      %s165 = scalar_select %p164, %s163, 7
      %s166 = smul.addr %s165, 4
      %s167 = scalar_lea.vmem %s0, %s166
      %s168 = smul.u32 4, %s14
      %s169 = smul.u32 4, %s14
      %p170 = scmp.lt.s32.totalorder %s169, 7
      %s171 = scalar_select %p170, %s169, 7
      %s172 = smul.addr %s171, 3
      %s173 = smul.addr %s172, 8
      %s174 = scalar_lea.vmem %s3, %s173
      %s175 = smul.u32 4, %s14
      %v177 = vld [vmem:[%s167] sm:$0xf]
      %v178 = vld [vmem:[%s167 + $0x4] sm:$0xf]
      %v179 = vld [vmem:[%s167 + $0x8] sm:$0xf]
      %v180 = vld [vmem:[%s167 + $0xc] sm:$0xf]
      %v181 = vld [vmem:[%s1] sm:$0xff]
      %v182 = vld [vmem:[%s1 + $0x8] sm:$0xf]
      %v183 = vld [vmem:[%s1 + $0xc] sm:$0xff]
      %v184 = vld [vmem:[%s1 + $0x14] sm:$0xf]
      %v185 = vld [vmem:[%s2] sm:$0x7]
      %v187 = vlaneseq
      %v188 = vshrl.u32 %v187, 7
      %v189 = vsub.s32 0, %v188
      %v190 = vrot.slane %v185, %v189
      %v191 = vlaneseq
      %v192 = vshrl.u32 %v191, 7
      %v193 = vsub.s32 1, %v192
      %v194 = vrot.slane %v185, %v193
      %v195 = vlaneseq
      %v196 = vshrl.u32 %v195, 7
      %v197 = vsub.s32 2, %v196
      %v198 = vrot.slane %v185, %v197
      %v206 = vunpack.c.l.b16 %v177
      %v207 = vunpack.c.l.b16 %v178
      %v208 = vunpack.c.l.b16 %v179
      %v209 = vunpack.c.l.b16 %v180
      %v210 = vpack.c.b16 %v207, %v206
      %v211 = vpack.c.b16 %v209, %v208
      %v216 = vunpack.c.l.b16 %v181
      %v217 = vunpack.c.h.b16 %v181
      %v218 = vunpack.c.l.b16 %v182
      %v219 = vunpack.c.l.b16 %v183
      %v220 = vunpack.c.h.b16 %v183
      %v221 = vunpack.c.l.b16 %v184
      %v222 = vpack.c.b16 %v219, %v216
      %v223 = vpack.c.b16 %v220, %v217
      %v224 = vpack.c.b16 %v221, %v218
      %vm228 = vcmask 130048
      %v230 = vsel %vm228, %v210, 0
      %v233 = vsel %vm228, %v211, 0
      %235 = vmatprep.subr.bf16.mxu0 %v223
      %236 = vmatpush1.bf16.msra.mxu0 %v222
      %237 = vmatprep.subr.bf16.mxu0 0
      %238 = vmatpush1.bf16.msra.mxu0 0
      %239 = vmatprep.subr.bf16.mxu0 0
      %240 = vmatpush1.bf16.msra.mxu0 0
      %241 = vmatprep.subr.bf16.mxu0 0
      %242 = vmatpush1.bf16.msra.mxu0 0
      %243 = vmatprep.subr.bf16.mxu0 0
      %244 = vmatpush1.bf16.msra.mxu0 0
      %245 = vmatprep.subr.bf16.mxu0 0
      %246 = vmatpush1.bf16.msra.mxu0 0
      %247 = vmatprep.subr.bf16.mxu0 0
      %248 = vmatpush1.bf16.msra.mxu0 0
      %249 = vmatprep.subr.bf16.mxu0 0
      %250 = vmatpush1.bf16.msra.mxu0 0
      %251 = vmatprep.subr.bf16.mxu0 0
      %252 = vmatpush1.bf16.msra.mxu0 0
      %253 = vmatprep.subr.bf16.mxu0 0
      %254 = vmatpush1.bf16.msra.mxu0 0
      %255 = vmatprep.subr.bf16.mxu0 0
      %256 = vmatpush1.bf16.msra.mxu0 0
      %257 = vmatprep.subr.bf16.mxu0 0
      %258 = vmatpush1.bf16.msra.mxu0 0
      %259 = vmatprep.subr.bf16.mxu0 0
      %260 = vmatpush1.bf16.msra.mxu0 0
      %261 = vmatprep.subr.bf16.mxu0 0
      %262 = vmatpush1.bf16.msra.mxu0 0
      %263 = vmatprep.subr.bf16.mxu0 0
      %264 = vmatpush1.bf16.msra.mxu0 0
      %265 = vmatprep.subr.bf16.mxu0 0
      %266 = vmatpush1.bf16.msra.mxu0 0
      %267 = vmatprep.mubr.bf16.mxu0 0
      %268 = vmatmul.mubr.bf16.gmra.mrb[0].mxu0 %v230
      %v269 = vpop.f32.mrb[0].mxu0
      %v270 = vadd.f32 %v190, %v269
      %v271 = vpop.f32.mrb[0].mxu0
      %v272 = vadd.f32 %v194, %v271
      %v273 = vpop.f32.mrb[0].mxu0
      %v274 = vadd.f32 %v190, %v273
      %v275 = vpop.f32.mrb[0].mxu0
      %v276 = vadd.f32 %v194, %v275
      %277 = vmatprep.mubr.bf16.mxu0 0
      %278 = vmatmul.mubr.bf16.gmra.mrb[0].mxu0 %v233
      %v279 = vpop.f32.mrb[0].mxu0
      %v280 = vadd.f32 %v190, %v279
      %v281 = vpop.f32.mrb[0].mxu0
      %v282 = vadd.f32 %v194, %v281
      %v283 = vpop.f32.mrb[0].mxu0
      %v284 = vadd.f32 %v190, %v283
      %v285 = vpop.f32.mrb[0].mxu0
      %v286 = vadd.f32 %v194, %v285
      %287 = vdwg.mxu0
      %288 = vmatprep.subr.bf16.mxu0 0
      %289 = vmatpush1.bf16.msra.mxu0 %v224
      %290 = vmatprep.subr.bf16.mxu0 0
      %291 = vmatpush1.bf16.msra.mxu0 0
      %292 = vmatprep.subr.bf16.mxu0 0
      %293 = vmatpush1.bf16.msra.mxu0 0
      %294 = vmatprep.subr.bf16.mxu0 0
      %295 = vmatpush1.bf16.msra.mxu0 0
      %296 = vmatprep.subr.bf16.mxu0 0
      %297 = vmatpush1.bf16.msra.mxu0 0
      %298 = vmatprep.subr.bf16.mxu0 0
      %299 = vmatpush1.bf16.msra.mxu0 0
      %300 = vmatprep.subr.bf16.mxu0 0
      %301 = vmatpush1.bf16.msra.mxu0 0
      %302 = vmatprep.subr.bf16.mxu0 0
      %303 = vmatpush1.bf16.msra.mxu0 0
      %304 = vmatprep.subr.bf16.mxu0 0
      %305 = vmatpush1.bf16.msra.mxu0 0
      %306 = vmatprep.subr.bf16.mxu0 0
      %307 = vmatpush1.bf16.msra.mxu0 0
      %308 = vmatprep.subr.bf16.mxu0 0
      %309 = vmatpush1.bf16.msra.mxu0 0
      %310 = vmatprep.subr.bf16.mxu0 0
      %311 = vmatpush1.bf16.msra.mxu0 0
      %312 = vmatprep.subr.bf16.mxu0 0
      %313 = vmatpush1.bf16.msra.mxu0 0
      %314 = vmatprep.subr.bf16.mxu0 0
      %315 = vmatpush1.bf16.msra.mxu0 0
      %316 = vmatprep.subr.bf16.mxu0 0
      %317 = vmatpush1.bf16.msra.mxu0 0
      %318 = vmatprep.subr.bf16.mxu0 0
      %319 = vmatpush1.bf16.msra.mxu0 0
      %320 = vmatprep.mubr.bf16.mxu0 0
      %321 = vmatmul.mubr.bf16.gmra.mrb[0].mxu0 %v230
      %v322 = vpop.f32.mrb[0].mxu0
      %v323 = vadd.f32 %v198, %v322
      %v324 = vpop.f32.mrb[0].mxu0
      %v325 = vpop.f32.mrb[0].mxu0
      %v326 = vadd.f32 %v198, %v325
      %v327 = vpop.f32.mrb[0].mxu0
      %328 = vmatprep.mubr.bf16.mxu0 0
      %329 = vmatmul.mubr.bf16.gmra.mrb[0].mxu0 %v233
      %v330 = vpop.f32.mrb[0].mxu0
      %v331 = vadd.f32 %v198, %v330
      %v332 = vpop.f32.mrb[0].mxu0
      %v333 = vpop.f32.mrb[0].mxu0
      %v334 = vadd.f32 %v198, %v333
      %v335 = vpop.f32.mrb[0].mxu0
      %336 = vdwg.mxu0
      %337 = vst [vmem:[%s174] sm:$0xff] %v270
      %338 = vst [vmem:[%s174 + $0x8] sm:$0xff] %v272
      %339 = vst [vmem:[%s174 + $0x10] sm:$0xff] %v323
      %340 = vst [vmem:[%s174 + $0x18] sm:$0xff] %v274
      %341 = vst [vmem:[%s174 + $0x20] sm:$0xff] %v276
      %342 = vst [vmem:[%s174 + $0x28] sm:$0xff] %v326
      %343 = vst [vmem:[%s174 + $0x30] sm:$0xff] %v280
      %344 = vst [vmem:[%s174 + $0x38] sm:$0xff] %v282
      %345 = vst [vmem:[%s174 + $0x40] sm:$0xff] %v331
      %346 = vst [vmem:[%s174 + $0x48] sm:$0xff] %v284
      %347 = vst [vmem:[%s174 + $0x50] sm:$0xff] %v286
      %348 = vst [vmem:[%s174 + $0x58] sm:$0xff] %v334
      %s349 = smul.u32 4, %s14
      %p350 = scmp.lt.s32.totalorder %s349, 7
      %s351 = scalar_select %p350, %s349, 7
      %s352 = smul.addr %s351, 3
      %s353 = smul.addr %s352, 8
      %s354 = scalar_lea.vmem %s3, %s353
      // Predicated region
      $region33: #{encoder_forward.2} parent=31 // pred_check
        %p355 = pneg %p100
      $region34: #{encoder_forward.2} parent=31 // pred_check_branch
        %357 = sbr.rel (%p355) target = $region36
      $region35: #{encoder_forward.2} parent=31 // pred_region
        %s358 = smul.u32 4, %s14
      $region36: #{encoder_forward.2} parent=31 // pred_fallthru
        _
    $region32: #{encoder_forward.2} parent=5 // pred_fallthru
      _
    %p359 = scmp.le.s32.totalorder 2, %s9
    // Predicated region
    $region37: #{encoder_forward.2} parent=5 // pred_check
      %p360 = pneg %p359
    $region38: #{encoder_forward.2} parent=5 // pred_check_branch
      %362 = sbr.rel (%p360) target = $region40
    $region39: #{encoder_forward.2} parent=5 // pred_region
      %s363 = ssub.s32 %s9, 2
      // Predicated region
      $region41: #{encoder_forward.2} parent=39 // pred_check
        %p364 = pneg %p106
      $region42: #{encoder_forward.2} parent=39 // pred_check_branch
        %366 = sbr.rel (%p364) target = $region44
      $region43: #{encoder_forward.2} parent=39 // pred_region
        %s367 = smul.u32 4, %s15
        %p368 = scmp.lt.s32.totalorder %s367, 7
        %s369 = scalar_select %p368, %s367, 7
        %s370 = smul.addr %s369, 3
        %s371 = smul.addr %s370, 8
        %s372 = scalar_lea.vmem %s3, %s371
      $region44: #{encoder_forward.2} parent=39 // pred_fallthru
        _
    $region40: #{encoder_forward.2} parent=5 // pred_fallthru
      _
  $region6: #{encoder_forward.2} parent=0 // loop_footer
    %s13 = sadd.s32 1, %s9
  $region7: #{encoder_forward.2} parent=0 // loop_footer_branch
    %8 = sbr.rel target = $region3
  $region8: #{encoder_forward.2} parent=0 // loop_exit
    _

// kernel: encoder_forward.3
$region0: #{encoder_forward.3}
  #allocation0 [shape = 'u32[]', space=smem, size = 0x4, offset = 0x4, fixed_abs, tag = 'smem constant byte address 0x4 - core index']
  #allocation1 [shape = 'u32[144,128]{1,0:T(1,128)}', space=vmem, size = 0x12000, scoped, tag = 'internal scratch']
  #allocation2 [shape = 'f32[8,128]{1,0:T(8,128)}', space=vmem, size = 0x1000, scoped, tag = 'scratch operand']
  %s0 = inlined_call_operand.vmem [shape: f32[8,8,384], index: 0, kind: input, shape index: {}]
  %s1 = inlined_call_operand.vmem [shape: f32[8,128], index: 1, kind: input, shape index: {}]
  %s2 = inlined_call_operand.vmem [shape: bf16[128,384], index: 2, kind: input, shape index: {}]
  %s3 = inlined_call_operand.vmem [shape: f32[8,384], index: 3, kind: input, shape index: {}]
  %s4 = inlined_call_operand.vmem [shape: f32[8,8,128], index: 4, kind: output, shape index: {}]
  %s5 = sld [smem:[#allocation0]]
  $region53: #{encoder_forward.3} parent=0
    _
  %s7 = ssub.s32 1, %s5
  %s8 = scalar_select 0, %s7, %s5
  loop: start=0, step=1, limit=4
  $region2: #{encoder_forward.3} parent=0 // loop_pre_header
    _
  $region3: #{encoder_forward.3} parent=0 // loop_header
    %s10 = sphi 0, %s14
    %p11 = scmp.ge.s32.totalorder %s10, 4
    %s20 = sphi 0, %s22
    %s23 = sphi 0, %s20
    %s24 = sphi 0, %s23
    %s40 = sphi 0, %s24
    %s44 = sphi 0, %s44
    %s46 = sphi 0, %s44
    %s47 = sphi 0, %s46
    %s61 = sphi 0, %s47
    %s65 = sphi 0, %s65
    %s67 = sphi 0, %s65
    %s68 = sphi 0, %s67
    %s82 = sphi 0, %s68
    %s86 = sphi 0, %s86
    %s88 = sphi 0, %s86
    %s89 = sphi 0, %s88
    %s103 = sphi 0, %s89
    %s109 = sphi 0, %s111
    %s112 = sphi 0, %s109
    %s113 = sphi 0, %s112
    %s129 = sphi 0, %s113
  $region4: #{encoder_forward.3} parent=0 // loop_header_branch
    %13 = sbr.rel (%p11) target = $region8
  $region5: #{encoder_forward.3} parent=0 // loop_body
    %s15 = ssub.s32 %s10, 1
    %s16 = ssub.s32 %s10, 2
    %s17 = sadd.s32 %s10, 1
    %s18 = ssub.s32 %s10, %s17
    %p19 = scmp.eq.s32.totalorder %s18, 0
    %s21 = sadd.s32 %s20, 1
    %s22 = scalar_select %p19, %s20, %s21
    %p25 = pneg %p19
    %p26 = scmp.eq.s32.totalorder %s10, 1
    %p27 = por %p25, %p26
    %p28 = scmp.ne.s32.totalorder %s20, %s23
    %p29 = scmp.eq.s32.totalorder %s10, 0
    %p30 = por %p28, %p29
    %p31 = scmp.ne.s32.totalorder %s20, %s23
    %p32 = scmp.eq.s32.totalorder %s15, 1
    %p33 = por %p31, %p32
    %p34 = scmp.ne.s32.totalorder %s23, %s24
    %p35 = scmp.eq.s32.totalorder %s15, 0
    %p36 = por %p34, %p35
    %p37 = scmp.ne.s32.totalorder %s23, %s24
    %p38 = scmp.eq.s32.totalorder %s16, 1
    %p39 = por %p37, %p38
    %p41 = scmp.ne.s32.totalorder %s24, %s40
    %p42 = scmp.eq.s32.totalorder %s16, 0
    %p43 = por %p41, %p42
    %s45 = sadd.s32 %s44, 1
    %p48 = scmp.eq.s32.totalorder %s10, 1
    %p49 = scmp.ne.s32.totalorder %s44, %s46
    %p50 = scmp.eq.s32.totalorder %s10, 0
    %p51 = por %p49, %p50
    %p52 = scmp.ne.s32.totalorder %s44, %s46
    %p53 = scmp.eq.s32.totalorder %s15, 1
    %p54 = por %p52, %p53
    %p55 = scmp.ne.s32.totalorder %s46, %s47
    %p56 = scmp.eq.s32.totalorder %s15, 0
    %p57 = por %p55, %p56
    %p58 = scmp.ne.s32.totalorder %s46, %s47
    %p59 = scmp.eq.s32.totalorder %s16, 1
    %p60 = por %p58, %p59
    %p62 = scmp.ne.s32.totalorder %s47, %s61
    %p63 = scmp.eq.s32.totalorder %s16, 0
    %p64 = por %p62, %p63
    %s66 = sadd.s32 %s65, 1
    %p69 = scmp.eq.s32.totalorder %s10, 1
    %p70 = scmp.ne.s32.totalorder %s65, %s67
    %p71 = scmp.eq.s32.totalorder %s10, 0
    %p72 = por %p70, %p71
    %p73 = scmp.ne.s32.totalorder %s65, %s67
    %p74 = scmp.eq.s32.totalorder %s15, 1
    %p75 = por %p73, %p74
    %p76 = scmp.ne.s32.totalorder %s67, %s68
    %p77 = scmp.eq.s32.totalorder %s15, 0
    %p78 = por %p76, %p77
    %p79 = scmp.ne.s32.totalorder %s67, %s68
    %p80 = scmp.eq.s32.totalorder %s16, 1
    %p81 = por %p79, %p80
    %p83 = scmp.ne.s32.totalorder %s68, %s82
    %p84 = scmp.eq.s32.totalorder %s16, 0
    %p85 = por %p83, %p84
    %s87 = sadd.s32 %s86, 1
    %p90 = scmp.eq.s32.totalorder %s10, 1
    %p91 = scmp.ne.s32.totalorder %s86, %s88
    %p92 = scmp.eq.s32.totalorder %s10, 0
    %p93 = por %p91, %p92
    %p94 = scmp.ne.s32.totalorder %s86, %s88
    %p95 = scmp.eq.s32.totalorder %s15, 1
    %p96 = por %p94, %p95
    %p97 = scmp.ne.s32.totalorder %s88, %s89
    %p98 = scmp.eq.s32.totalorder %s15, 0
    %p99 = por %p97, %p98
    %p100 = scmp.ne.s32.totalorder %s88, %s89
    %p101 = scmp.eq.s32.totalorder %s16, 1
    %p102 = por %p100, %p101
    %p104 = scmp.ne.s32.totalorder %s89, %s103
    %p105 = scmp.eq.s32.totalorder %s16, 0
    %p106 = por %p104, %p105
    %s107 = ssub.s32 %s10, %s17
    %p108 = scmp.eq.s32.totalorder %s107, 0
    %s110 = sadd.s32 %s109, 1
    %s111 = scalar_select %p108, %s109, %s110
    %p114 = pneg %p108
    %p115 = scmp.eq.s32.totalorder %s10, 1
    %p116 = por %p114, %p115
    %p117 = scmp.ne.s32.totalorder %s109, %s112
    %p118 = scmp.eq.s32.totalorder %s10, 0
    %p119 = por %p117, %p118
    %p120 = scmp.ne.s32.totalorder %s109, %s112
    %p121 = scmp.eq.s32.totalorder %s15, 1
    %p122 = por %p120, %p121
    %p123 = scmp.ne.s32.totalorder %s112, %s113
    %p124 = scmp.eq.s32.totalorder %s15, 0
    %p125 = por %p123, %p124
    %p126 = scmp.ne.s32.totalorder %s112, %s113
    %p127 = scmp.eq.s32.totalorder %s16, 1
    %p128 = por %p126, %p127
    %p130 = scmp.ne.s32.totalorder %s113, %s129
    %p131 = scmp.eq.s32.totalorder %s16, 0
    %p132 = por %p130, %p131
    %p133 = scmp.le.s32.totalorder 1, %s10
    %p134 = scmp.lt.s32.totalorder %s10, 3
    %p135 = pnand %p133, %p134
    %p136 = pneg %p135
    // Predicated region
    $region9: #{encoder_forward.3} parent=5 // pred_check
      _
    $region10: #{encoder_forward.3} parent=5 // pred_check_branch
      %138 = sbr.rel (%p135) target = $region12
    $region11: #{encoder_forward.3} parent=5 // pred_region
      %s139 = ssub.s32 %s10, 1
      // Predicated region
      $region13: #{encoder_forward.3} parent=11 // pred_check
        %p140 = pneg %p57
      $region14: #{encoder_forward.3} parent=11 // pred_check_branch
        %142 = sbr.rel (%p140) target = $region16
      $region15: #{encoder_forward.3} parent=11 // pred_region
        _
      $region16: #{encoder_forward.3} parent=11 // pred_fallthru
        _
      // Predicated region
      $region17: #{encoder_forward.3} parent=11 // pred_check
        %p143 = pneg %p78
      $region18: #{encoder_forward.3} parent=11 // pred_check_branch
        %145 = sbr.rel (%p143) target = $region20
      $region19: #{encoder_forward.3} parent=11 // pred_region
        _
      $region20: #{encoder_forward.3} parent=11 // pred_fallthru
        _
      // Predicated region
      $region21: #{encoder_forward.3} parent=11 // pred_check
        %p146 = pneg %p99
      $region22: #{encoder_forward.3} parent=11 // pred_check_branch
        %148 = sbr.rel (%p146) target = $region24
      $region23: #{encoder_forward.3} parent=11 // pred_region
        _
      $region24: #{encoder_forward.3} parent=11 // pred_fallthru
        _
    $region12: #{encoder_forward.3} parent=5 // pred_fallthru
      _
    %p149 = scmp.lt.s32.totalorder %s10, 2
    // Predicated region
    $region25: #{encoder_forward.3} parent=5 // pred_check
      %p150 = pneg %p149
    $region26: #{encoder_forward.3} parent=5 // pred_check_branch
      %152 = sbr.rel (%p150) target = $region28
    $region27: #{encoder_forward.3} parent=5 // pred_region
      // Predicated region
      $region29: #{encoder_forward.3} parent=27 // pred_check
        %p153 = pneg %p30
      $region30: #{encoder_forward.3} parent=27 // pred_check_branch
        %155 = sbr.rel (%p153) target = $region32
      $region31: #{encoder_forward.3} parent=27 // pred_region
        %s156 = smul.u32 4, %s10
        %p157 = scmp.lt.s32.totalorder %s156, 7
        %s158 = scalar_select %p157, %s156, 7
        %s159 = smul.addr %s158, 3
        %s160 = smul.addr %s159, 8
        %s161 = scalar_lea.vmem %s0, %s160
        %s162 = smul.u32 4, %s10
      $region32: #{encoder_forward.3} parent=27 // pred_fallthru
        _
    $region28: #{encoder_forward.3} parent=5 // pred_fallthru
      _
    %p163 = scmp.le.s32.totalorder 1, %s10
    %p164 = scmp.lt.s32.totalorder %s10, 3
    %p165 = pnand %p163, %p164
    %p166 = pneg %p165
    // Predicated region
    $region33: #{encoder_forward.3} parent=5 // pred_check
      _
    $region34: #{encoder_forward.3} parent=5 // pred_check_branch
      %168 = sbr.rel (%p165) target = $region36
    $region35: #{encoder_forward.3} parent=5 // pred_region
      %s169 = ssub.s32 %s10, 1
      %s170 = smul.u32 4, %s15
      %p171 = scmp.lt.s32.totalorder %s170, 7
      %s172 = scalar_select %p171, %s170, 7
      %s173 = smul.addr %s172, 3
      %s174 = smul.addr %s173, 8
      %s175 = scalar_lea.vmem %s0, %s174
      %p176 = pneg %p36
      %p177 = pneg %p33
      %p178 = pneg %p57
      %p179 = pneg %p54
      %p180 = pneg %p78
      %p181 = pneg %p75
      %p182 = pneg %p99
      %p183 = pneg %p96
      %p184 = pneg %p125
      %p185 = pneg %p122
      %s186 = smul.u32 4, %s15
      %p187 = scmp.lt.s32.totalorder %s186, 7
      %s188 = scalar_select %p187, %s186, 7
      %s189 = smul.addr %s188, 8
      %s190 = scalar_lea.vmem %s4, %s189
      %s191 = smul.u32 4, %s15
      %p192 = scmp.lt.s32.totalorder %s191, 7
      %s193 = scalar_select %p192, %s191, 7
      %s194 = smul.addr %s193, 3
      %s195 = smul.addr %s194, 8
      %s196 = scalar_lea.vmem %s0, %s195
      %s197 = smul.u32 4, %s15
      %s198 = smul.u32 4, %s15
      %p199 = scmp.lt.s32.totalorder %s198, 7
      %s200 = scalar_select %p199, %s198, 7
      %s201 = smul.addr %s200, 8
      %s202 = scalar_lea.vmem %s4, %s201
      %s203 = smul.u32 4, %s15
      %p205 = scmp.eq.s32.totalorder %s15, 0
      // Predicated region
      $region37: #{encoder_forward.3} parent=35 // pred_check
        %p206 = pneg %p205
      $region38: #{encoder_forward.3} parent=35 // pred_check_branch
        %208 = sbr.rel (%p206) target = $region40
      $region39: #{encoder_forward.3} parent=35 // pred_region
        %v209 = vld [vmem:[%s1] sm:$0xff]
        %210 = vst [vmem:[#allocation2] sm:$0xff] %v209
      $region40: #{encoder_forward.3} parent=35 // pred_fallthru
        _
      %v211 = vld [vmem:[%s3] sm:$0xff]
      %v212 = vld [vmem:[%s3 + $0x8] sm:$0xff]
      %v213 = vld [vmem:[%s3 + $0x10] sm:$0xff]
      %v214 = vld [vmem:[#allocation2] sm:$0xff]
      %v215 = vld [vmem:[%s196] sm:$0xff]
      %v216 = vld [vmem:[%s196 + $0x8] sm:$0xff]
      %v217 = vld [vmem:[%s196 + $0x10] sm:$0xff]
      %v218 = vpack.c.bf16 %v214, %v214
      %v219 = vld [vmem:[%s2] sm:$0xff]
      %v220 = vld [vmem:[%s2 + $0x8] sm:$0xf]
      %v221 = vld [vmem:[%s2 + $0xc] sm:$0xff]
      %v222 = vld [vmem:[%s2 + $0x14] sm:$0xf]
      %v223 = vld [vmem:[%s2 + $0x18] sm:$0xff]
      %v224 = vld [vmem:[%s2 + $0x20] sm:$0xf]
      %v225 = vld [vmem:[%s2 + $0x24] sm:$0xff]
      %v226 = vld [vmem:[%s2 + $0x2c] sm:$0xf]
      %v227 = vld [vmem:[%s2 + $0x30] sm:$0xff]
      %v228 = vld [vmem:[%s2 + $0x38] sm:$0xf]
      %v229 = vld [vmem:[%s2 + $0x3c] sm:$0xff]
      %v230 = vld [vmem:[%s2 + $0x44] sm:$0xf]
      %v231 = vld [vmem:[%s2 + $0x48] sm:$0xff]
      %v232 = vld [vmem:[%s2 + $0x50] sm:$0xf]
      %v233 = vld [vmem:[%s2 + $0x54] sm:$0xff]
      %v234 = vld [vmem:[%s2 + $0x5c] sm:$0xf]
      %v235 = vld [vmem:[%s2 + $0x60] sm:$0xff]
      %v236 = vld [vmem:[%s2 + $0x68] sm:$0xf]
      %v237 = vld [vmem:[%s2 + $0x6c] sm:$0xff]
      %v238 = vld [vmem:[%s2 + $0x74] sm:$0xf]
      %v239 = vld [vmem:[%s2 + $0x78] sm:$0xff]
      %v240 = vld [vmem:[%s2 + $0x80] sm:$0xf]
      %v241 = vld [vmem:[%s2 + $0x84] sm:$0xff]
      %v242 = vld [vmem:[%s2 + $0x8c] sm:$0xf]
      %v243 = vld [vmem:[%s2 + $0x90] sm:$0xff]
      %v244 = vld [vmem:[%s2 + $0x98] sm:$0xf]
      %v245 = vld [vmem:[%s2 + $0x9c] sm:$0xff]
      %v246 = vld [vmem:[%s2 + $0xa4] sm:$0xf]
      %v247 = vld [vmem:[%s2 + $0xa8] sm:$0xff]
      %v248 = vld [vmem:[%s2 + $0xb0] sm:$0xf]
      %v249 = vld [vmem:[%s2 + $0xb4] sm:$0xff]
      %v250 = vld [vmem:[%s2 + $0xbc] sm:$0xf]
      %v283 = vunpack.c.l.b16 %v219
      %v284 = vunpack.c.h.b16 %v219
      %v285 = vunpack.c.l.b16 %v220
      %v286 = vunpack.c.l.b16 %v221
      %v287 = vunpack.c.h.b16 %v221
      %v288 = vunpack.c.l.b16 %v222
      %v289 = vunpack.c.l.b16 %v223
      %v290 = vunpack.c.h.b16 %v223
      %v291 = vunpack.c.l.b16 %v224
      %v292 = vunpack.c.l.b16 %v225
      %v293 = vunpack.c.h.b16 %v225
      %v294 = vunpack.c.l.b16 %v226
      %v295 = vunpack.c.l.b16 %v227
      %v296 = vunpack.c.h.b16 %v227
      %v297 = vunpack.c.l.b16 %v228
      %v298 = vunpack.c.l.b16 %v229
      %v299 = vunpack.c.h.b16 %v229
      %v300 = vunpack.c.l.b16 %v230
      %v301 = vunpack.c.l.b16 %v231
      %v302 = vunpack.c.h.b16 %v231
      %v303 = vunpack.c.l.b16 %v232
      %v304 = vunpack.c.l.b16 %v233
      %v305 = vunpack.c.h.b16 %v233
      %v306 = vunpack.c.l.b16 %v234
      %v307 = vunpack.c.l.b16 %v235
      %v308 = vunpack.c.h.b16 %v235
      %v309 = vunpack.c.l.b16 %v236
      %v310 = vunpack.c.l.b16 %v237
      %v311 = vunpack.c.h.b16 %v237
      %v312 = vunpack.c.l.b16 %v238
      %v313 = vunpack.c.l.b16 %v239
      %v314 = vunpack.c.h.b16 %v239
      %v315 = vunpack.c.l.b16 %v240
      %v316 = vunpack.c.l.b16 %v241
      %v317 = vunpack.c.h.b16 %v241
      %v318 = vunpack.c.l.b16 %v242
      %v319 = vunpack.c.l.b16 %v243
      %v320 = vunpack.c.h.b16 %v243
      %v321 = vunpack.c.l.b16 %v244
      %v322 = vunpack.c.l.b16 %v245
      %v323 = vunpack.c.h.b16 %v245
      %v324 = vunpack.c.l.b16 %v246
      %v325 = vunpack.c.l.b16 %v247
      %v326 = vunpack.c.h.b16 %v247
      %v327 = vunpack.c.l.b16 %v248
      %v328 = vunpack.c.l.b16 %v249
      %v329 = vunpack.c.h.b16 %v249
      %v330 = vunpack.c.l.b16 %v250
      %v331 = vpack.c.b16 %v286, %v283
      %v332 = vpack.c.b16 %v287, %v284
      %v333 = vpack.c.b16 %v288, %v285
      %v334 = vpack.c.b16 %v292, %v289
      %v335 = vpack.c.b16 %v293, %v290
      %v336 = vpack.c.b16 %v294, %v291
      %v337 = vpack.c.b16 %v298, %v295
      %v338 = vpack.c.b16 %v299, %v296
      %v339 = vpack.c.b16 %v300, %v297
      %v340 = vpack.c.b16 %v304, %v301
      %v341 = vpack.c.b16 %v305, %v302
      %v342 = vpack.c.b16 %v306, %v303
      %v343 = vpack.c.b16 %v310, %v307
      %v344 = vpack.c.b16 %v311, %v308
      %v345 = vpack.c.b16 %v312, %v309
      %v346 = vpack.c.b16 %v316, %v313
      %v347 = vpack.c.b16 %v317, %v314
      %v348 = vpack.c.b16 %v318, %v315
      %v349 = vpack.c.b16 %v322, %v319
      %v350 = vpack.c.b16 %v323, %v320
      %v351 = vpack.c.b16 %v324, %v321
      %v352 = vpack.c.b16 %v328, %v325
      %v353 = vpack.c.b16 %v329, %v326
      %v354 = vpack.c.b16 %v330, %v327
      %379 = vmatprep.subr.bf16.mxu0 %v332
      %380 = vmatpush1.bf16.msra.mxu0 %v331
      %381 = vmatprep.subr.bf16.mxu0 %v335
      %382 = vmatpush1.bf16.msra.mxu0 %v334
      %383 = vmatprep.subr.bf16.mxu0 %v338
      %384 = vmatpush1.bf16.msra.mxu0 %v337
      %385 = vmatprep.subr.bf16.mxu0 %v341
      %386 = vmatpush1.bf16.msra.mxu0 %v340
      %387 = vmatprep.subr.bf16.mxu0 %v344
      %388 = vmatpush1.bf16.msra.mxu0 %v343
      %389 = vmatprep.subr.bf16.mxu0 %v347
      %390 = vmatpush1.bf16.msra.mxu0 %v346
      %391 = vmatprep.subr.bf16.mxu0 %v350
      %392 = vmatpush1.bf16.msra.mxu0 %v349
      %393 = vmatprep.subr.bf16.mxu0 %v353
      %394 = vmatpush1.bf16.msra.mxu0 %v352
      %395 = vmatprep.subr.bf16.mxu0 0
      %396 = vmatpush1.bf16.msra.mxu0 0
      %397 = vmatprep.subr.bf16.mxu0 0
      %398 = vmatpush1.bf16.msra.mxu0 0
      %399 = vmatprep.subr.bf16.mxu0 0
      %400 = vmatpush1.bf16.msra.mxu0 0
      %401 = vmatprep.subr.bf16.mxu0 0
      %402 = vmatpush1.bf16.msra.mxu0 0
      %403 = vmatprep.subr.bf16.mxu0 0
      %404 = vmatpush1.bf16.msra.mxu0 0
      %405 = vmatprep.subr.bf16.mxu0 0
      %406 = vmatpush1.bf16.msra.mxu0 0
      %407 = vmatprep.subr.bf16.mxu0 0
      %408 = vmatpush1.bf16.msra.mxu0 0
      %409 = vmatprep.subr.bf16.mxu0 0
      %410 = vmatpush1.bf16.msra.mxu0 0
      %411 = vmatprep.mubr.bf16.mxu0 0
      %412 = vmatmul.mubr.bf16.gmra.mrb[0].mxu0 %v218
      %v413 = vpop.f32.mrb[0].mxu0
      %v414 = vadd.f32 %v211, %v413
      %v415 = vpop.f32.mrb[0].mxu0
      %v416 = vadd.f32 %v212, %v415
      %v417 = vpop.f32.mrb[0].mxu0
      %v418 = vpop.f32.mrb[0].mxu0
      %419 = vdwg.mxu0
      %420 = vmatprep.subr.bf16.mxu0 0
      %421 = vmatpush1.bf16.msra.mxu0 %v333
      %422 = vmatprep.subr.bf16.mxu0 0
      %423 = vmatpush1.bf16.msra.mxu0 %v336
      %424 = vmatprep.subr.bf16.mxu0 0
      %425 = vmatpush1.bf16.msra.mxu0 %v339
      %426 = vmatprep.subr.bf16.mxu0 0
      %427 = vmatpush1.bf16.msra.mxu0 %v342
      %428 = vmatprep.subr.bf16.mxu0 0
      %429 = vmatpush1.bf16.msra.mxu0 %v345
      %430 = vmatprep.subr.bf16.mxu0 0
      %431 = vmatpush1.bf16.msra.mxu0 %v348
      %432 = vmatprep.subr.bf16.mxu0 0
      %433 = vmatpush1.bf16.msra.mxu0 %v351
      %434 = vmatprep.subr.bf16.mxu0 0
      %435 = vmatpush1.bf16.msra.mxu0 %v354
      %436 = vmatprep.subr.bf16.mxu0 0
      %437 = vmatpush1.bf16.msra.mxu0 0
      %438 = vmatprep.subr.bf16.mxu0 0
      %439 = vmatpush1.bf16.msra.mxu0 0
      %440 = vmatprep.subr.bf16.mxu0 0
      %441 = vmatpush1.bf16.msra.mxu0 0
      %442 = vmatprep.subr.bf16.mxu0 0
      %443 = vmatpush1.bf16.msra.mxu0 0
      %444 = vmatprep.subr.bf16.mxu0 0
      %445 = vmatpush1.bf16.msra.mxu0 0
      %446 = vmatprep.subr.bf16.mxu0 0
      %447 = vmatpush1.bf16.msra.mxu0 0
      %448 = vmatprep.subr.bf16.mxu0 0
      %449 = vmatpush1.bf16.msra.mxu0 0
      %450 = vmatprep.subr.bf16.mxu0 0
      %451 = vmatpush1.bf16.msra.mxu0 0
      %452 = vmatprep.mubr.bf16.mxu0 0
      %453 = vmatmul.mubr.bf16.gmra.mrb[0].mxu0 %v218
      %v454 = vpop.f32.mrb[0].mxu0
      %v455 = vadd.f32 %v213, %v454
      %v456 = vpop.f32.mrb[0].mxu0
      %v457 = vpop.f32.mrb[0].mxu0
      %v458 = vpop.f32.mrb[0].mxu0
      %459 = vdwg.mxu0
      %v460 = vadd.f32 %v215, %v414
      %v461 = vxor.u32 %v460, 2147483648
      %v462 = vmul.f32 %v461, 1.442695
      %v463 = vpow.pop %v462
      %v464 = vadd.f32 %v463, 1.0
      %v465 = vrcp.pop %v464
      %v466 = vmul.f32 1.0, %v465
      %v467 = vadd.f32 %v216, %v416
      %v468 = vxor.u32 %v467, 2147483648
      %v469 = vmul.f32 %v468, 1.442695
      %v470 = vpow.pop %v469
      %v471 = vadd.f32 %v470, 1.0
      %v472 = vrcp.pop %v471
      %v473 = vmul.f32 1.0, %v472
      %v474 = vmul.f32 %v466, %v455
      %v475 = vadd.f32 %v217, %v474
      %v476 = vtanh.pop %v475
      %v477 = vsub.f32 1.0, %v473
      %v478 = vmul.f32 %v477, %v476
      %v479 = vmul.f32 %v473, %v214
      %v480 = vadd.f32 %v478, %v479
      %481 = vst [vmem:[%s202] sm:$0xff] %v480
      %s482 = scalar_lea.vmem %s196, 24
      %v483 = vld [vmem:[%s482] sm:$0xff]
      %v484 = vld [vmem:[%s482 + $0x8] sm:$0xff]
      %v485 = vld [vmem:[%s482 + $0x10] sm:$0xff]
      %v486 = vpack.c.bf16 %v480, %v480
      %v487 = vld [vmem:[%s2] sm:$0xff]
      %v488 = vld [vmem:[%s2 + $0x8] sm:$0xf]
      %v489 = vld [vmem:[%s2 + $0xc] sm:$0xff]
      %v490 = vld [vmem:[%s2 + $0x14] sm:$0xf]
      %v491 = vld [vmem:[%s2 + $0x18] sm:$0xff]
      %v492 = vld [vmem:[%s2 + $0x20] sm:$0xf]
      %v493 = vld [vmem:[%s2 + $0x24] sm:$0xff]
      %v494 = vld [vmem:[%s2 + $0x2c] sm:$0xf]
      %v495 = vld [vmem:[%s2 + $0x30] sm:$0xff]
      %v496 = vld [vmem:[%s2 + $0x38] sm:$0xf]
      %v497 = vld [vmem:[%s2 + $0x3c] sm:$0xff]
      %v498 = vld [vmem:[%s2 + $0x44] sm:$0xf]
      %v499 = vld [vmem:[%s2 + $0x48] sm:$0xff]
      %v500 = vld [vmem:[%s2 + $0x50] sm:$0xf]
      %v501 = vld [vmem:[%s2 + $0x54] sm:$0xff]
      %v502 = vld [vmem:[%s2 + $0x5c] sm:$0xf]
      %v503 = vld [vmem:[%s2 + $0x60] sm:$0xff]
      %v504 = vld [vmem:[%s2 + $0x68] sm:$0xf]
      %v505 = vld [vmem:[%s2 + $0x6c] sm:$0xff]
      %v506 = vld [vmem:[%s2 + $0x74] sm:$0xf]
      %v507 = vld [vmem:[%s2 + $0x78] sm:$0xff]
      %v508 = vld [vmem:[%s2 + $0x80] sm:$0xf]
      %v509 = vld [vmem:[%s2 + $0x84] sm:$0xff]
      %v510 = vld [vmem:[%s2 + $0x8c] sm:$0xf]
      %v511 = vld [vmem:[%s2 + $0x90] sm:$0xff]
      %v512 = vld [vmem:[%s2 + $0x98] sm:$0xf]
      %v513 = vld [vmem:[%s2 + $0x9c] sm:$0xff]
      %v514 = vld [vmem:[%s2 + $0xa4] sm:$0xf]
      %v515 = vld [vmem:[%s2 + $0xa8] sm:$0xff]
      %v516 = vld [vmem:[%s2 + $0xb0] sm:$0xf]
      %v517 = vld [vmem:[%s2 + $0xb4] sm:$0xff]
      %v518 = vld [vmem:[%s2 + $0xbc] sm:$0xf]
      %v551 = vunpack.c.l.b16 %v487
      %v552 = vunpack.c.h.b16 %v487
      %v553 = vunpack.c.l.b16 %v488
      %v554 = vunpack.c.l.b16 %v489
      %v555 = vunpack.c.h.b16 %v489
      %v556 = vunpack.c.l.b16 %v490
      %v557 = vunpack.c.l.b16 %v491
      %v558 = vunpack.c.h.b16 %v491
      %v559 = vunpack.c.l.b16 %v492
      %v560 = vunpack.c.l.b16 %v493
      %v561 = vunpack.c.h.b16 %v493
      %v562 = vunpack.c.l.b16 %v494
      %v563 = vunpack.c.l.b16 %v495
      %v564 = vunpack.c.h.b16 %v495
      %v565 = vunpack.c.l.b16 %v496
      %v566 = vunpack.c.l.b16 %v497
      %v567 = vunpack.c.h.b16 %v497
      %v568 = vunpack.c.l.b16 %v498
      %v569 = vunpack.c.l.b16 %v499
      %v570 = vunpack.c.h.b16 %v499
      %v571 = vunpack.c.l.b16 %v500
      %v572 = vunpack.c.l.b16 %v501
      %v573 = vunpack.c.h.b16 %v501
      %v574 = vunpack.c.l.b16 %v502
      %v575 = vunpack.c.l.b16 %v503
      %v576 = vunpack.c.h.b16 %v503
      %v577 = vunpack.c.l.b16 %v504
      %v578 = vunpack.c.l.b16 %v505
      %v579 = vunpack.c.h.b16 %v505
      %v580 = vunpack.c.l.b16 %v506
      %v581 = vunpack.c.l.b16 %v507
      %v582 = vunpack.c.h.b16 %v507
      %v583 = vunpack.c.l.b16 %v508
      %v584 = vunpack.c.l.b16 %v509
      %v585 = vunpack.c.h.b16 %v509
      %v586 = vunpack.c.l.b16 %v510
      %v587 = vunpack.c.l.b16 %v511
      %v588 = vunpack.c.h.b16 %v511
      %v589 = vunpack.c.l.b16 %v512
      %v590 = vunpack.c.l.b16 %v513
      %v591 = vunpack.c.h.b16 %v513
      %v592 = vunpack.c.l.b16 %v514
      %v593 = vunpack.c.l.b16 %v515
      %v594 = vunpack.c.h.b16 %v515
      %v595 = vunpack.c.l.b16 %v516
      %v596 = vunpack.c.l.b16 %v517
      %v597 = vunpack.c.h.b16 %v517
      %v598 = vunpack.c.l.b16 %v518
      %v599 = vpack.c.b16 %v554, %v551
      %v600 = vpack.c.b16 %v555, %v552
      %v601 = vpack.c.b16 %v556, %v553
      %v602 = vpack.c.b16 %v560, %v557
      %v603 = vpack.c.b16 %v561, %v558
      %v604 = vpack.c.b16 %v562, %v559
      %v605 = vpack.c.b16 %v566, %v563
      %v606 = vpack.c.b16 %v567, %v564
      %v607 = vpack.c.b16 %v568, %v565
      %v608 = vpack.c.b16 %v572, %v569
      %v609 = vpack.c.b16 %v573, %v570
      %v610 = vpack.c.b16 %v574, %v571
      %v611 = vpack.c.b16 %v578, %v575
      %v612 = vpack.c.b16 %v579, %v576
      %v613 = vpack.c.b16 %v580, %v577
      %v614 = vpack.c.b16 %v584, %v581
      %v615 = vpack.c.b16 %v585, %v582
      %v616 = vpack.c.b16 %v586, %v583
      %v617 = vpack.c.b16 %v590, %v587
      %v618 = vpack.c.b16 %v591, %v588
      %v619 = vpack.c.b16 %v592, %v589
      %v620 = vpack.c.b16 %v596, %v593
      %v621 = vpack.c.b16 %v597, %v594
      %v622 = vpack.c.b16 %v598, %v595
      %647 = vmatprep.subr.bf16.mxu0 %v600
      %648 = vmatpush1.bf16.msra.mxu0 %v599
      %649 = vmatprep.subr.bf16.mxu0 %v603
      %650 = vmatpush1.bf16.msra.mxu0 %v602
      %651 = vmatprep.subr.bf16.mxu0 %v606
      %652 = vmatpush1.bf16.msra.mxu0 %v605
      %653 = vmatprep.subr.bf16.mxu0 %v609
      %654 = vmatpush1.bf16.msra.mxu0 %v608
      %655 = vmatprep.subr.bf16.mxu0 %v612
      %656 = vmatpush1.bf16.msra.mxu0 %v611
      %657 = vmatprep.subr.bf16.mxu0 %v615
      %658 = vmatpush1.bf16.msra.mxu0 %v614
      %659 = vmatprep.subr.bf16.mxu0 %v618
      %660 = vmatpush1.bf16.msra.mxu0 %v617
      %661 = vmatprep.subr.bf16.mxu0 %v621
      %662 = vmatpush1.bf16.msra.mxu0 %v620
      %663 = vmatprep.subr.bf16.mxu0 0
      %664 = vmatpush1.bf16.msra.mxu0 0
      %665 = vmatprep.subr.bf16.mxu0 0
      %666 = vmatpush1.bf16.msra.mxu0 0
      %667 = vmatprep.subr.bf16.mxu0 0
      %668 = vmatpush1.bf16.msra.mxu0 0
      %669 = vmatprep.subr.bf16.mxu0 0
      %670 = vmatpush1.bf16.msra.mxu0 0
      %671 = vmatprep.subr.bf16.mxu0 0
      %672 = vmatpush1.bf16.msra.mxu0 0
      %673 = vmatprep.subr.bf16.mxu0 0
      %674 = vmatpush1.bf16.msra.mxu0 0
      %675 = vmatprep.subr.bf16.mxu0 0
      %676 = vmatpush1.bf16.msra.mxu0 0
      %677 = vmatprep.subr.bf16.mxu0 0
      %678 = vmatpush1.bf16.msra.mxu0 0
      %679 = vmatprep.mubr.bf16.mxu0 0
      %680 = vmatmul.mubr.bf16.gmra.mrb[0].mxu0 %v486
      %v681 = vpop.f32.mrb[0].mxu0
      %v682 = vadd.f32 %v211, %v681
      %v683 = vpop.f32.mrb[0].mxu0
      %v684 = vadd.f32 %v212, %v683
      %v685 = vpop.f32.mrb[0].mxu0
      %v686 = vpop.f32.mrb[0].mxu0
      %687 = vdwg.mxu0
      %688 = vmatprep.subr.bf16.mxu0 0
      %689 = vmatpush1.bf16.msra.mxu0 %v601
      %690 = vmatprep.subr.bf16.mxu0 0
      %691 = vmatpush1.bf16.msra.mxu0 %v604
      %692 = vmatprep.subr.bf16.mxu0 0
      %693 = vmatpush1.bf16.msra.mxu0 %v607
      %694 = vmatprep.subr.bf16.mxu0 0
      %695 = vmatpush1.bf16.msra.mxu0 %v610
      %696 = vmatprep.subr.bf16.mxu0 0
      %697 = vmatpush1.bf16.msra.mxu0 %v613
      %698 = vmatprep.subr.bf16.mxu0 0
      %699 = vmatpush1.bf16.msra.mxu0 %v616
      %700 = vmatprep.subr.bf16.mxu0 0
      %701 = vmatpush1.bf16.msra.mxu0 %v619
      %702 = vmatprep.subr.bf16.mxu0 0
      %703 = vmatpush1.bf16.msra.mxu0 %v622
      %704 = vmatprep.subr.bf16.mxu0 0
      %705 = vmatpush1.bf16.msra.mxu0 0
      %706 = vmatprep.subr.bf16.mxu0 0
      %707 = vmatpush1.bf16.msra.mxu0 0
      %708 = vmatprep.subr.bf16.mxu0 0
      %709 = vmatpush1.bf16.msra.mxu0 0
      %710 = vmatprep.subr.bf16.mxu0 0
      %711 = vmatpush1.bf16.msra.mxu0 0
      %712 = vmatprep.subr.bf16.mxu0 0
      %713 = vmatpush1.bf16.msra.mxu0 0
      %714 = vmatprep.subr.bf16.mxu0 0
      %715 = vmatpush1.bf16.msra.mxu0 0
      %716 = vmatprep.subr.bf16.mxu0 0
      %717 = vmatpush1.bf16.msra.mxu0 0
      %718 = vmatprep.subr.bf16.mxu0 0
      %719 = vmatpush1.bf16.msra.mxu0 0
      %720 = vmatprep.mubr.bf16.mxu0 0
      %721 = vmatmul.mubr.bf16.gmra.mrb[0].mxu0 %v486
      %v722 = vpop.f32.mrb[0].mxu0
      %v723 = vadd.f32 %v213, %v722
      %v724 = vpop.f32.mrb[0].mxu0
      %v725 = vpop.f32.mrb[0].mxu0
      %v726 = vpop.f32.mrb[0].mxu0
      %727 = vdwg.mxu0
      %v728 = vadd.f32 %v483, %v682
      %v729 = vxor.u32 %v728, 2147483648
      %v730 = vmul.f32 %v729, 1.442695
      %v731 = vpow.pop %v730
      %v732 = vadd.f32 %v731, 1.0
      %v733 = vrcp.pop %v732
      %v734 = vmul.f32 1.0, %v733
      %v735 = vadd.f32 %v484, %v684
      %v736 = vxor.u32 %v735, 2147483648
      %v737 = vmul.f32 %v736, 1.442695
      %v738 = vpow.pop %v737
      %v739 = vadd.f32 %v738, 1.0
      %v740 = vrcp.pop %v739
      %v741 = vmul.f32 1.0, %v740
      %v742 = vmul.f32 %v734, %v723
      %v743 = vadd.f32 %v485, %v742
      %v744 = vtanh.pop %v743
      %v745 = vsub.f32 1.0, %v741
      %v746 = vmul.f32 %v745, %v744
      %v747 = vmul.f32 %v741, %v480
      %v748 = vadd.f32 %v746, %v747
      %s749 = scalar_lea.vmem %s202, 8
      %750 = vst [vmem:[%s749] sm:$0xff] %v748
      %s751 = scalar_lea.vmem %s196, 48
      %v752 = vld [vmem:[%s751] sm:$0xff]
      %v753 = vld [vmem:[%s751 + $0x8] sm:$0xff]
      %v754 = vld [vmem:[%s751 + $0x10] sm:$0xff]
      %v755 = vpack.c.bf16 %v748, %v748
      %v756 = vld [vmem:[%s2] sm:$0xff]
      %v757 = vld [vmem:[%s2 + $0x8] sm:$0xf]
      %v758 = vld [vmem:[%s2 + $0xc] sm:$0xff]
      %v759 = vld [vmem:[%s2 + $0x14] sm:$0xf]
      %v760 = vld [vmem:[%s2 + $0x18] sm:$0xff]
      %v761 = vld [vmem:[%s2 + $0x20] sm:$0xf]
      %v762 = vld [vmem:[%s2 + $0x24] sm:$0xff]
      %v763 = vld [vmem:[%s2 + $0x2c] sm:$0xf]
      %v764 = vld [vmem:[%s2 + $0x30] sm:$0xff]
      %v765 = vld [vmem:[%s2 + $0x38] sm:$0xf]
      %v766 = vld [vmem:[%s2 + $0x3c] sm:$0xff]
      %v767 = vld [vmem:[%s2 + $0x44] sm:$0xf]
      %v768 = vld [vmem:[%s2 + $0x48] sm:$0xff]
      %v769 = vld [vmem:[%s2 + $0x50] sm:$0xf]
      %v770 = vld [vmem:[%s2 + $0x54] sm:$0xff]
      %v771 = vld [vmem:[%s2 + $0x5c] sm:$0xf]
      %v772 = vld [vmem:[%s2 + $0x60] sm:$0xff]
      %v773 = vld [vmem:[%s2 + $0x68] sm:$0xf]
      %v774 = vld [vmem:[%s2 + $0x6c] sm:$0xff]
      %v775 = vld [vmem:[%s2 + $0x74] sm:$0xf]
      %v776 = vld [vmem:[%s2 + $0x78] sm:$0xff]
      %v777 = vld [vmem:[%s2 + $0x80] sm:$0xf]
      %v778 = vld [vmem:[%s2 + $0x84] sm:$0xff]
      %v779 = vld [vmem:[%s2 + $0x8c] sm:$0xf]
      %v780 = vld [vmem:[%s2 + $0x90] sm:$0xff]
      %v781 = vld [vmem:[%s2 + $0x98] sm:$0xf]
      %v782 = vld [vmem:[%s2 + $0x9c] sm:$0xff]
      %v783 = vld [vmem:[%s2 + $0xa4] sm:$0xf]
      %v784 = vld [vmem:[%s2 + $0xa8] sm:$0xff]
      %v785 = vld [vmem:[%s2 + $0xb0] sm:$0xf]
      %v786 = vld [vmem:[%s2 + $0xb4] sm:$0xff]
      %v787 = vld [vmem:[%s2 + $0xbc] sm:$0xf]
      %v820 = vunpack.c.l.b16 %v756
      %v821 = vunpack.c.h.b16 %v756
      %v822 = vunpack.c.l.b16 %v757
      %v823 = vunpack.c.l.b16 %v758
      %v824 = vunpack.c.h.b16 %v758
      %v825 = vunpack.c.l.b16 %v759
      %v826 = vunpack.c.l.b16 %v760
      %v827 = vunpack.c.h.b16 %v760
      %v828 = vunpack.c.l.b16 %v761
      %v829 = vunpack.c.l.b16 %v762
      %v830 = vunpack.c.h.b16 %v762
      %v831 = vunpack.c.l.b16 %v763
      %v832 = vunpack.c.l.b16 %v764
      %v833 = vunpack.c.h.b16 %v764
      %v834 = vunpack.c.l.b16 %v765
      %v835 = vunpack.c.l.b16 %v766
      %v836 = vunpack.c.h.b16 %v766
      %v837 = vunpack.c.l.b16 %v767
      %v838 = vunpack.c.l.b16 %v768
      %v839 = vunpack.c.h.b16 %v768
      %v840 = vunpack.c.l.b16 %v769
      %v841 = vunpack.c.l.b16 %v770
      %v842 = vunpack.c.h.b16 %v770
      %v843 = vunpack.c.l.b16 %v771
      %v844 = vunpack.c.l.b16 %v772
      %v845 = vunpack.c.h.b16 %v772
      %v846 = vunpack.c.l.b16 %v773
      %v847 = vunpack.c.l.b16 %v774
      %v848 = vunpack.c.h.b16 %v774
      %v849 = vunpack.c.l.b16 %v775
      %v850 = vunpack.c.l.b16 %v776
      %v851 = vunpack.c.h.b16 %v776
      %v852 = vunpack.c.l.b16 %v777
      %v853 = vunpack.c.l.b16 %v778
      %v854 = vunpack.c.h.b16 %v778
      %v855 = vunpack.c.l.b16 %v779
      %v856 = vunpack.c.l.b16 %v780
      %v857 = vunpack.c.h.b16 %v780
      %v858 = vunpack.c.l.b16 %v781
      %v859 = vunpack.c.l.b16 %v782
      %v860 = vunpack.c.h.b16 %v782
      %v861 = vunpack.c.l.b16 %v783
      %v862 = vunpack.c.l.b16 %v784
      %v863 = vunpack.c.h.b16 %v784
      %v864 = vunpack.c.l.b16 %v785
      %v865 = vunpack.c.l.b16 %v786
      %v866 = vunpack.c.h.b16 %v786
      %v867 = vunpack.c.l.b16 %v787
      %v868 = vpack.c.b16 %v823, %v820
      %v869 = vpack.c.b16 %v824, %v821
      %v870 = vpack.c.b16 %v825, %v822
      %v871 = vpack.c.b16 %v829, %v826
      %v872 = vpack.c.b16 %v830, %v827
      %v873 = vpack.c.b16 %v831, %v828
      %v874 = vpack.c.b16 %v835, %v832
      %v875 = vpack.c.b16 %v836, %v833
      %v876 = vpack.c.b16 %v837, %v834
      %v877 = vpack.c.b16 %v841, %v838
      %v878 = vpack.c.b16 %v842, %v839
      %v879 = vpack.c.b16 %v843, %v840
      %v880 = vpack.c.b16 %v847, %v844
      %v881 = vpack.c.b16 %v848, %v845
      %v882 = vpack.c.b16 %v849, %v846
      %v883 = vpack.c.b16 %v853, %v850
      %v884 = vpack.c.b16 %v854, %v851
      %v885 = vpack.c.b16 %v855, %v852
      %v886 = vpack.c.b16 %v859, %v856
      %v887 = vpack.c.b16 %v860, %v857
      %v888 = vpack.c.b16 %v861, %v858
      %v889 = vpack.c.b16 %v865, %v862
      %v890 = vpack.c.b16 %v866, %v863
      %v891 = vpack.c.b16 %v867, %v864
      %916 = vmatprep.subr.bf16.mxu0 %v869
      %917 = vmatpush1.bf16.msra.mxu0 %v868
      %918 = vmatprep.subr.bf16.mxu0 %v872
      %919 = vmatpush1.bf16.msra.mxu0 %v871
      %920 = vmatprep.subr.bf16.mxu0 %v875
      %921 = vmatpush1.bf16.msra.mxu0 %v874
      %922 = vmatprep.subr.bf16.mxu0 %v878
      %923 = vmatpush1.bf16.msra.mxu0 %v877
      %924 = vmatprep.subr.bf16.mxu0 %v881
      %925 = vmatpush1.bf16.msra.mxu0 %v880
      %926 = vmatprep.subr.bf16.mxu0 %v884
      %927 = vmatpush1.bf16.msra.mxu0 %v883
      %928 = vmatprep.subr.bf16.mxu0 %v887
      %929 = vmatpush1.bf16.msra.mxu0 %v886
      %930 = vmatprep.subr.bf16.mxu0 %v890
      %931 = vmatpush1.bf16.msra.mxu0 %v889
      %932 = vmatprep.subr.bf16.mxu0 0
      %933 = vmatpush1.bf16.msra.mxu0 0
      %934 = vmatprep.subr.bf16.mxu0 0
      %935 = vmatpush1.bf16.msra.mxu0 0
      %936 = vmatprep.subr.bf16.mxu0 0
      %937 = vmatpush1.bf16.msra.mxu0 0
      %938 = vmatprep.subr.bf16.mxu0 0
      %939 = vmatpush1.bf16.msra.mxu0 0
      %940 = vmatprep.subr.bf16.mxu0 0
      %941 = vmatpush1.bf16.msra.mxu0 0
      %942 = vmatprep.subr.bf16.mxu0 0
      %943 = vmatpush1.bf16.msra.mxu0 0
      %944 = vmatprep.subr.bf16.mxu0 0
      %945 = vmatpush1.bf16.msra.mxu0 0
      %946 = vmatprep.subr.bf16.mxu0 0
      %947 = vmatpush1.bf16.msra.mxu0 0
      %948 = vmatprep.mubr.bf16.mxu0 0
      %949 = vmatmul.mubr.bf16.gmra.mrb[0].mxu0 %v755
      %v950 = vpop.f32.mrb[0].mxu0
      %v951 = vadd.f32 %v211, %v950
      %v952 = vpop.f32.mrb[0].mxu0
      %v953 = vadd.f32 %v212, %v952
      %v954 = vpop.f32.mrb[0].mxu0
      %v955 = vpop.f32.mrb[0].mxu0
      %956 = vdwg.mxu0
      %957 = vmatprep.subr.bf16.mxu0 0
      %958 = vmatpush1.bf16.msra.mxu0 %v870
      %959 = vmatprep.subr.bf16.mxu0 0
      %960 = vmatpush1.bf16.msra.mxu0 %v873
      %961 = vmatprep.subr.bf16.mxu0 0
      %962 = vmatpush1.bf16.msra.mxu0 %v876
      %963 = vmatprep.subr.bf16.mxu0 0
      %964 = vmatpush1.bf16.msra.mxu0 %v879
      %965 = vmatprep.subr.bf16.mxu0 0
      %966 = vmatpush1.bf16.msra.mxu0 %v882
      %967 = vmatprep.subr.bf16.mxu0 0
      %968 = vmatpush1.bf16.msra.mxu0 %v885
      %969 = vmatprep.subr.bf16.mxu0 0
      %970 = vmatpush1.bf16.msra.mxu0 %v888
      %971 = vmatprep.subr.bf16.mxu0 0
      %972 = vmatpush1.bf16.msra.mxu0 %v891
      %973 = vmatprep.subr.bf16.mxu0 0
      %974 = vmatpush1.bf16.msra.mxu0 0
      %975 = vmatprep.subr.bf16.mxu0 0
      %976 = vmatpush1.bf16.msra.mxu0 0
      %977 = vmatprep.subr.bf16.mxu0 0
      %978 = vmatpush1.bf16.msra.mxu0 0
      %979 = vmatprep.subr.bf16.mxu0 0
      %980 = vmatpush1.bf16.msra.mxu0 0
      %981 = vmatprep.subr.bf16.mxu0 0
      %982 = vmatpush1.bf16.msra.mxu0 0
      %983 = vmatprep.subr.bf16.mxu0 0
      %984 = vmatpush1.bf16.msra.mxu0 0
      %985 = vmatprep.subr.bf16.mxu0 0
      %986 = vmatpush1.bf16.msra.mxu0 0
      %987 = vmatprep.subr.bf16.mxu0 0
      %988 = vmatpush1.bf16.msra.mxu0 0
      %989 = vmatprep.mubr.bf16.mxu0 0
      %990 = vmatmul.mubr.bf16.gmra.mrb[0].mxu0 %v755
      %v991 = vpop.f32.mrb[0].mxu0
      %v992 = vadd.f32 %v213, %v991
      %v993 = vpop.f32.mrb[0].mxu0
      %v994 = vpop.f32.mrb[0].mxu0
      %v995 = vpop.f32.mrb[0].mxu0
      %996 = vdwg.mxu0
      %v997 = vadd.f32 %v752, %v951
      %v998 = vxor.u32 %v997, 2147483648
      %v999 = vmul.f32 %v998, 1.442695
      %v1000 = vpow.pop %v999
      %v1001 = vadd.f32 %v1000, 1.0
      %v1002 = vrcp.pop %v1001
      %v1003 = vmul.f32 1.0, %v1002
      %v1004 = vadd.f32 %v753, %v953
      %v1005 = vxor.u32 %v1004, 2147483648
      %v1006 = vmul.f32 %v1005, 1.442695
      %v1007 = vpow.pop %v1006
      %v1008 = vadd.f32 %v1007, 1.0
      %v1009 = vrcp.pop %v1008
      %v1010 = vmul.f32 1.0, %v1009
      %v1011 = vmul.f32 %v1003, %v992
      %v1012 = vadd.f32 %v754, %v1011
      %v1013 = vtanh.pop %v1012
      %v1014 = vsub.f32 1.0, %v1010
      %v1015 = vmul.f32 %v1014, %v1013
      %v1016 = vmul.f32 %v1010, %v748
      %v1017 = vadd.f32 %v1015, %v1016
      %s1018 = scalar_lea.vmem %s202, 16
      %1019 = vst [vmem:[%s1018] sm:$0xff] %v1017
      %s1020 = scalar_lea.vmem %s196, 72
      %v1021 = vld [vmem:[%s1020] sm:$0xff]
      %v1022 = vld [vmem:[%s1020 + $0x8] sm:$0xff]
      %v1023 = vld [vmem:[%s1020 + $0x10] sm:$0xff]
      %v1024 = vpack.c.bf16 %v1017, %v1017
      %v1025 = vld [vmem:[%s2] sm:$0xff]
      %v1026 = vld [vmem:[%s2 + $0x8] sm:$0xf]
      %v1027 = vld [vmem:[%s2 + $0xc] sm:$0xff]
      %v1028 = vld [vmem:[%s2 + $0x14] sm:$0xf]
      %v1029 = vld [vmem:[%s2 + $0x18] sm:$0xff]
      %v1030 = vld [vmem:[%s2 + $0x20] sm:$0xf]
      %v1031 = vld [vmem:[%s2 + $0x24] sm:$0xff]
      %v1032 = vld [vmem:[%s2 + $0x2c] sm:$0xf]
      %v1033 = vld [vmem:[%s2 + $0x30] sm:$0xff]
      %v1034 = vld [vmem:[%s2 + $0x38] sm:$0xf]
      %v1035 = vld [vmem:[%s2 + $0x3c] sm:$0xff]
      %v1036 = vld [vmem:[%s2 + $0x44] sm:$0xf]
      %v1037 = vld [vmem:[%s2 + $0x48] sm:$0xff]
      %v1038 = vld [vmem:[%s2 + $0x50] sm:$0xf]
      %v1039 = vld [vmem:[%s2 + $0x54] sm:$0xff]
      %v1040 = vld [vmem:[%s2 + $0x5c] sm:$0xf]
      %v1041 = vld [vmem:[%s2 + $0x60] sm:$0xff]
      %v1042 = vld [vmem:[%s2 + $0x68] sm:$0xf]
      %v1043 = vld [vmem:[%s2 + $0x6c] sm:$0xff]
      %v1044 = vld [vmem:[%s2 + $0x74] sm:$0xf]
      %v1045 = vld [vmem:[%s2 + $0x78] sm:$0xff]
      %v1046 = vld [vmem:[%s2 + $0x80] sm:$0xf]
      %v1047 = vld [vmem:[%s2 + $0x84] sm:$0xff]
      %v1048 = vld [vmem:[%s2 + $0x8c] sm:$0xf]
      %v1049 = vld [vmem:[%s2 + $0x90] sm:$0xff]
      %v1050 = vld [vmem:[%s2 + $0x98] sm:$0xf]
      %v1051 = vld [vmem:[%s2 + $0x9c] sm:$0xff]
      %v1052 = vld [vmem:[%s2 + $0xa4] sm:$0xf]
      %v1053 = vld [vmem:[%s2 + $0xa8] sm:$0xff]
      %v1054 = vld [vmem:[%s2 + $0xb0] sm:$0xf]
      %v1055 = vld [vmem:[%s2 + $0xb4] sm:$0xff]
      %v1056 = vld [vmem:[%s2 + $0xbc] sm:$0xf]
      %v1089 = vunpack.c.l.b16 %v1025
      %v1090 = vunpack.c.h.b16 %v1025
      %v1091 = vunpack.c.l.b16 %v1026
      %v1092 = vunpack.c.l.b16 %v1027
      %v1093 = vunpack.c.h.b16 %v1027
      %v1094 = vunpack.c.l.b16 %v1028
      %v1095 = vunpack.c.l.b16 %v1029
      %v1096 = vunpack.c.h.b16 %v1029
      %v1097 = vunpack.c.l.b16 %v1030
      %v1098 = vunpack.c.l.b16 %v1031
      %v1099 = vunpack.c.h.b16 %v1031
      %v1100 = vunpack.c.l.b16 %v1032
      %v1101 = vunpack.c.l.b16 %v1033
      %v1102 = vunpack.c.h.b16 %v1033
      %v1103 = vunpack.c.l.b16 %v1034
      %v1104 = vunpack.c.l.b16 %v1035
      %v1105 = vunpack.c.h.b16 %v1035
      %v1106 = vunpack.c.l.b16 %v1036
      %v1107 = vunpack.c.l.b16 %v1037
      %v1108 = vunpack.c.h.b16 %v1037
      %v1109 = vunpack.c.l.b16 %v1038
      %v1110 = vunpack.c.l.b16 %v1039
      %v1111 = vunpack.c.h.b16 %v1039
      %v1112 = vunpack.c.l.b16 %v1040
      %v1113 = vunpack.c.l.b16 %v1041
      %v1114 = vunpack.c.h.b16 %v1041
      %v1115 = vunpack.c.l.b16 %v1042
      %v1116 = vunpack.c.l.b16 %v1043
      %v1117 = vunpack.c.h.b16 %v1043
      %v1118 = vunpack.c.l.b16 %v1044
      %v1119 = vunpack.c.l.b16 %v1045
      %v1120 = vunpack.c.h.b16 %v1045
      %v1121 = vunpack.c.l.b16 %v1046
      %v1122 = vunpack.c.l.b16 %v1047
      %v1123 = vunpack.c.h.b16 %v1047
      %v1124 = vunpack.c.l.b16 %v1048
      %v1125 = vunpack.c.l.b16 %v1049
      %v1126 = vunpack.c.h.b16 %v1049
      %v1127 = vunpack.c.l.b16 %v1050
      %v1128 = vunpack.c.l.b16 %v1051
      %v1129 = vunpack.c.h.b16 %v1051
      %v1130 = vunpack.c.l.b16 %v1052
      %v1131 = vunpack.c.l.b16 %v1053
      %v1132 = vunpack.c.h.b16 %v1053
      %v1133 = vunpack.c.l.b16 %v1054
      %v1134 = vunpack.c.l.b16 %v1055
      %v1135 = vunpack.c.h.b16 %v1055
      %v1136 = vunpack.c.l.b16 %v1056
      %v1137 = vpack.c.b16 %v1092, %v1089
      %v1138 = vpack.c.b16 %v1093, %v1090
      %v1139 = vpack.c.b16 %v1094, %v1091
      %v1140 = vpack.c.b16 %v1098, %v1095
      %v1141 = vpack.c.b16 %v1099, %v1096
      %v1142 = vpack.c.b16 %v1100, %v1097
      %v1143 = vpack.c.b16 %v1104, %v1101
      %v1144 = vpack.c.b16 %v1105, %v1102
      %v1145 = vpack.c.b16 %v1106, %v1103
      %v1146 = vpack.c.b16 %v1110, %v1107
      %v1147 = vpack.c.b16 %v1111, %v1108
      %v1148 = vpack.c.b16 %v1112, %v1109
      %v1149 = vpack.c.b16 %v1116, %v1113
      %v1150 = vpack.c.b16 %v1117, %v1114
      %v1151 = vpack.c.b16 %v1118, %v1115
      %v1152 = vpack.c.b16 %v1122, %v1119
      %v1153 = vpack.c.b16 %v1123, %v1120
      %v1154 = vpack.c.b16 %v1124, %v1121
      %v1155 = vpack.c.b16 %v1128, %v1125
      %v1156 = vpack.c.b16 %v1129, %v1126
      %v1157 = vpack.c.b16 %v1130, %v1127
      %v1158 = vpack.c.b16 %v1134, %v1131
      %v1159 = vpack.c.b16 %v1135, %v1132
      %v1160 = vpack.c.b16 %v1136, %v1133
      %1185 = vmatprep.subr.bf16.mxu0 %v1138
      %1186 = vmatpush1.bf16.msra.mxu0 %v1137
      %1187 = vmatprep.subr.bf16.mxu0 %v1141
      %1188 = vmatpush1.bf16.msra.mxu0 %v1140
      %1189 = vmatprep.subr.bf16.mxu0 %v1144
      %1190 = vmatpush1.bf16.msra.mxu0 %v1143
      %1191 = vmatprep.subr.bf16.mxu0 %v1147
      %1192 = vmatpush1.bf16.msra.mxu0 %v1146
      %1193 = vmatprep.subr.bf16.mxu0 %v1150
      %1194 = vmatpush1.bf16.msra.mxu0 %v1149
      %1195 = vmatprep.subr.bf16.mxu0 %v1153
      %1196 = vmatpush1.bf16.msra.mxu0 %v1152
      %1197 = vmatprep.subr.bf16.mxu0 %v1156
      %1198 = vmatpush1.bf16.msra.mxu0 %v1155
      %1199 = vmatprep.subr.bf16.mxu0 %v1159
      %1200 = vmatpush1.bf16.msra.mxu0 %v1158
      %1201 = vmatprep.subr.bf16.mxu0 0
      %1202 = vmatpush1.bf16.msra.mxu0 0
      %1203 = vmatprep.subr.bf16.mxu0 0
      %1204 = vmatpush1.bf16.msra.mxu0 0
      %1205 = vmatprep.subr.bf16.mxu0 0
      %1206 = vmatpush1.bf16.msra.mxu0 0
      %1207 = vmatprep.subr.bf16.mxu0 0
      %1208 = vmatpush1.bf16.msra.mxu0 0
      %1209 = vmatprep.subr.bf16.mxu0 0
      %1210 = vmatpush1.bf16.msra.mxu0 0
      %1211 = vmatprep.subr.bf16.mxu0 0
      %1212 = vmatpush1.bf16.msra.mxu0 0
      %1213 = vmatprep.subr.bf16.mxu0 0
      %1214 = vmatpush1.bf16.msra.mxu0 0
      %1215 = vmatprep.subr.bf16.mxu0 0
      %1216 = vmatpush1.bf16.msra.mxu0 0
      %1217 = vmatprep.mubr.bf16.mxu0 0
      %1218 = vmatmul.mubr.bf16.gmra.mrb[0].mxu0 %v1024
      %v1219 = vpop.f32.mrb[0].mxu0
      %v1220 = vadd.f32 %v211, %v1219
      %v1221 = vpop.f32.mrb[0].mxu0
      %v1222 = vadd.f32 %v212, %v1221
      %v1223 = vpop.f32.mrb[0].mxu0
      %v1224 = vpop.f32.mrb[0].mxu0
      %1225 = vdwg.mxu0
      %1226 = vmatprep.subr.bf16.mxu0 0
      %1227 = vmatpush1.bf16.msra.mxu0 %v1139
      %1228 = vmatprep.subr.bf16.mxu0 0
      %1229 = vmatpush1.bf16.msra.mxu0 %v1142
      %1230 = vmatprep.subr.bf16.mxu0 0
      %1231 = vmatpush1.bf16.msra.mxu0 %v1145
      %1232 = vmatprep.subr.bf16.mxu0 0
      %1233 = vmatpush1.bf16.msra.mxu0 %v1148
      %1234 = vmatprep.subr.bf16.mxu0 0
      %1235 = vmatpush1.bf16.msra.mxu0 %v1151
      %1236 = vmatprep.subr.bf16.mxu0 0
      %1237 = vmatpush1.bf16.msra.mxu0 %v1154
      %1238 = vmatprep.subr.bf16.mxu0 0
      %1239 = vmatpush1.bf16.msra.mxu0 %v1157
      %1240 = vmatprep.subr.bf16.mxu0 0
      %1241 = vmatpush1.bf16.msra.mxu0 %v1160
      %1242 = vmatprep.subr.bf16.mxu0 0
      %1243 = vmatpush1.bf16.msra.mxu0 0
      %1244 = vmatprep.subr.bf16.mxu0 0
      %1245 = vmatpush1.bf16.msra.mxu0 0
      %1246 = vmatprep.subr.bf16.mxu0 0
      %1247 = vmatpush1.bf16.msra.mxu0 0
      %1248 = vmatprep.subr.bf16.mxu0 0
      %1249 = vmatpush1.bf16.msra.mxu0 0
      %1250 = vmatprep.subr.bf16.mxu0 0
      %1251 = vmatpush1.bf16.msra.mxu0 0
      %1252 = vmatprep.subr.bf16.mxu0 0
      %1253 = vmatpush1.bf16.msra.mxu0 0
      %1254 = vmatprep.subr.bf16.mxu0 0
      %1255 = vmatpush1.bf16.msra.mxu0 0
      %1256 = vmatprep.subr.bf16.mxu0 0
      %1257 = vmatpush1.bf16.msra.mxu0 0
      %1258 = vmatprep.mubr.bf16.mxu0 0
      %1259 = vmatmul.mubr.bf16.gmra.mrb[0].mxu0 %v1024
      %v1260 = vpop.f32.mrb[0].mxu0
      %v1261 = vadd.f32 %v213, %v1260
      %v1262 = vpop.f32.mrb[0].mxu0
      %v1263 = vpop.f32.mrb[0].mxu0
      %v1264 = vpop.f32.mrb[0].mxu0
      %1265 = vdwg.mxu0
      %v1266 = vadd.f32 %v1021, %v1220
      %v1267 = vxor.u32 %v1266, 2147483648
      %v1268 = vmul.f32 %v1267, 1.442695
      %v1269 = vpow.pop %v1268
      %v1270 = vadd.f32 %v1269, 1.0
      %v1271 = vrcp.pop %v1270
      %v1272 = vmul.f32 1.0, %v1271
      %v1273 = vadd.f32 %v1022, %v1222
      %v1274 = vxor.u32 %v1273, 2147483648
      %v1275 = vmul.f32 %v1274, 1.442695
      %v1276 = vpow.pop %v1275
      %v1277 = vadd.f32 %v1276, 1.0
      %v1278 = vrcp.pop %v1277
      %v1279 = vmul.f32 1.0, %v1278
      %v1280 = vmul.f32 %v1272, %v1261
      %v1281 = vadd.f32 %v1023, %v1280
      %v1282 = vtanh.pop %v1281
      %v1283 = vsub.f32 1.0, %v1279
      %v1284 = vmul.f32 %v1283, %v1282
      %v1285 = vmul.f32 %v1279, %v1017
      %v1286 = vadd.f32 %v1284, %v1285
      %s1287 = scalar_lea.vmem %s202, 24
      %1288 = vst [vmem:[%s1287] sm:$0xff] %v1286
      %1289 = vst [vmem:[#allocation2] sm:$0xff] %v1286
      %s1290 = smul.u32 4, %s15
      %p1291 = scmp.lt.s32.totalorder %s1290, 7
      %s1292 = scalar_select %p1291, %s1290, 7
      %s1293 = smul.addr %s1292, 8
      %s1294 = scalar_lea.vmem %s4, %s1293
      // Predicated region
      $region41: #{encoder_forward.3} parent=35 // pred_check
        %p1295 = pneg %p122
      $region42: #{encoder_forward.3} parent=35 // pred_check_branch
        %1297 = sbr.rel (%p1295) target = $region44
      $region43: #{encoder_forward.3} parent=35 // pred_region
        %s1298 = smul.u32 4, %s15
      $region44: #{encoder_forward.3} parent=35 // pred_fallthru
        _
    $region36: #{encoder_forward.3} parent=5 // pred_fallthru
      _
    %p1299 = scmp.le.s32.totalorder 2, %s10
    // Predicated region
    $region45: #{encoder_forward.3} parent=5 // pred_check
      %p1300 = pneg %p1299
    $region46: #{encoder_forward.3} parent=5 // pred_check_branch
      %1302 = sbr.rel (%p1300) target = $region48
    $region47: #{encoder_forward.3} parent=5 // pred_region
      %s1303 = ssub.s32 %s10, 2
      // Predicated region
      $region49: #{encoder_forward.3} parent=47 // pred_check
        %p1304 = pneg %p128
      $region50: #{encoder_forward.3} parent=47 // pred_check_branch
        %1306 = sbr.rel (%p1304) target = $region52
      $region51: #{encoder_forward.3} parent=47 // pred_region
        %s1307 = smul.u32 4, %s16
        %p1308 = scmp.lt.s32.totalorder %s1307, 7
        %s1309 = scalar_select %p1308, %s1307, 7
        %s1310 = smul.addr %s1309, 8
        %s1311 = scalar_lea.vmem %s4, %s1310
      $region52: #{encoder_forward.3} parent=47 // pred_fallthru
        _
    $region48: #{encoder_forward.3} parent=5 // pred_fallthru
      _
  $region6: #{encoder_forward.3} parent=0 // loop_footer
    %s14 = sadd.s32 1, %s10
  $region7: #{encoder_forward.3} parent=0 // loop_footer_branch
    %9 = sbr.rel target = $region3
  $region8: #{encoder_forward.3} parent=0 // loop_exit
    _

</llo_original>
